<compile_context>
chip_gen: v7x
topology: tpu7x:2x2x1
jax: 0.10.0
libtpu: 0.0.40
codegen_flags: <defaults>
</compile_context>

<pallas_src>
import math
from typing import NamedTuple, Tuple

import jax
import jax.numpy as jnp
from jax.experimental import pallas as pl
from jax.experimental.pallas import tpu as pltpu


# ----------------------------------------------------------------------------
# Model configuration
# ----------------------------------------------------------------------------

class BlockCfg(NamedTuple):
    in_ch: int
    exp_ch: int
    out_ch: int
    kernel: int
    stride: Tuple[int, int]     # (stride_freq, stride_time)
    use_hs: bool


# Small inverted-residual setting: the freq dim reduces to 1 so the final
# squeeze(2) of the PyTorch forward is well defined.
INVERTED_RESIDUAL_SETTING = [
    BlockCfg(in_ch=8,  exp_ch=16, out_ch=8,  kernel=3, stride=(2, 1), use_hs=True),
    BlockCfg(in_ch=8,  exp_ch=24, out_ch=12, kernel=3, stride=(2, 1), use_hs=True),
    BlockCfg(in_ch=12, exp_ch=36, out_ch=12, kernel=3, stride=(2, 1), use_hs=True),
    BlockCfg(in_ch=12, exp_ch=48, out_ch=12, kernel=3, stride=(1, 1), use_hs=True),  # residual
]
IN_CHANNELS = 1
FIRST_OUT = INVERTED_RESIDUAL_SETTING[0].in_ch
LAST_MULT = 6
BN_EPS = 1e-3

CONV0_K = 3 * 3 * IN_CHANNELS                       # 9 im2col taps for the stem conv
CONV0_KPAD = -(-CONV0_K // 8) * 8                   # padded to a sublane multiple (16)
C_LAST = LAST_MULT * INVERTED_RESIDUAL_SETTING[-1].out_ch      # 72
C_LAST_PAD = -(-C_LAST // 128) * 128                # lane-dense output width (128)
SLAB_LANES = C_LAST_PAD                             # packed weight slab lane width


# ----------------------------------------------------------------------------
# Raw parameters (PyTorch-like init)
# ----------------------------------------------------------------------------

def _bn_init(n):
    return dict(gamma=jnp.ones((n,), jnp.float32),
                beta=jnp.zeros((n,), jnp.float32),
                mean=jnp.zeros((n,), jnp.float32),
                var=jnp.ones((n,), jnp.float32))


def init_params(key):
    """Raw parameters mirroring the PyTorch module init (kaiming fan_out convs,
    eval-mode BatchNorm with eps=1e-3)."""
    params = {}
    key, k = jax.random.split(key)
    params["conv0_w"] = jax.random.normal(k, (3, 3, IN_CHANNELS, FIRST_OUT), jnp.float32) \
        * math.sqrt(2.0 / (FIRST_OUT * 3 * 3))
    params["bn0"] = _bn_init(FIRST_OUT)

    blocks = []
    for c in INVERTED_RESIDUAL_SETTING:
        bp = {}
        if c.exp_ch != c.in_ch:
            key, k = jax.random.split(key)
            bp["exp_w"] = jax.random.normal(k, (c.in_ch, c.exp_ch), jnp.float32) \
                * math.sqrt(2.0 / c.exp_ch)
            bp["exp_bn"] = _bn_init(c.exp_ch)
        key, k = jax.random.split(key)
        bp["dw_w"] = jax.random.normal(k, (c.kernel, c.kernel, c.exp_ch), jnp.float32) \
            * math.sqrt(2.0 / (c.kernel * c.kernel))
        bp["dw_bn"] = _bn_init(c.exp_ch)
        key, k = jax.random.split(key)
        bp["proj_w"] = jax.random.normal(k, (c.exp_ch, c.out_ch), jnp.float32) \
            * math.sqrt(2.0 / c.out_ch)
        bp["proj_bn"] = _bn_init(c.out_ch)
        blocks.append(bp)
    params["blocks"] = blocks

    last_in = INVERTED_RESIDUAL_SETTING[-1].out_ch
    last_out = LAST_MULT * last_in
    key, k = jax.random.split(key)
    params["last_w"] = jax.random.normal(k, (last_in, last_out), jnp.float32) \
        * math.sqrt(2.0 / last_out)
    params["last_bn"] = _bn_init(last_out)
    return params


# ----------------------------------------------------------------------------
# Static layer plan (shared by the packer, the kernel builder and the wrapper)
# ----------------------------------------------------------------------------

def _use_res(c):
    return c.stride == (1, 1) and c.in_ch == c.out_ch


def _fusion_flags(cfgs):
    """fuse[i] == True  =>  block i's 1x1 projection is pre-multiplied (offline) into
    block i+1's 1x1 expansion (legal: no activation and no residual sits between them)."""
    flags = []
    for i, c in enumerate(cfgs):
        nxt = cfgs[i + 1] if i + 1 < len(cfgs) else None
        flags.append(nxt is not None and not _use_res(c) and not _use_res(nxt)
                     and nxt.exp_ch != nxt.in_ch)
    return flags


def _plan():
    """Static list of packed slab entries: (name, K, N)."""
    cfgs = INVERTED_RESIDUAL_SETTING
    fuse = _fusion_flags(cfgs)
    layers = [("conv0", CONV0_KPAD, FIRST_OUT)]
    for i, c in enumerate(cfgs):
        if i > 0 and fuse[i - 1]:
            layers.append((f"pe{i}", cfgs[i - 1].exp_ch, c.exp_ch))      # proj(i-1) @ exp(i)
        elif c.exp_ch != c.in_ch:
            layers.append((f"exp{i}", c.in_ch, c.exp_ch))
        layers.append((f"dw{i}", 9, c.exp_ch))
        if not fuse[i]:
            layers.append((f"proj{i}", c.exp_ch, c.out_ch))
    layers.append(("last", cfgs[-1].out_ch, C_LAST_PAD))
    return layers


def _ops():
    """Static op sequence interpreted (at trace time) by the fused kernel body."""
    cfgs = INVERTED_RESIDUAL_SETTING
    fuse = _fusion_flags(cfgs)
    ops = [("dense", "conv0", True)]
    for i, c in enumerate(cfgs):
        if _use_res(c):
            ops.append(("save_res",))
        if i > 0 and fuse[i - 1]:
            ops.append(("dense", f"pe{i}", c.use_hs))
        elif c.exp_ch != c.in_ch:
            ops.append(("dense", f"exp{i}", c.use_hs))
        ops.append(("dw", f"dw{i}", c.stride[0], c.use_hs))
        if not fuse[i]:
            ops.append(("dense", f"proj{i}", None))            # projection: no activation
            if _use_res(c):
                ops.append(("add_res",))
    ops.append(("dense", "last", True))
    return ops


def _offsets():
    """Row offsets of each layer inside the packed weight slab (static Python ints).
    Layout per layer: ceil(K/8)*8 weight rows, then 8 rows whose first row is the bias."""
    meta, off = {}, 0
    for name, k, n in _plan():
        kp = -(-k // 8) * 8
        meta[name] = (off, k, n, off + kp)
        off += kp + 8
    return meta, off


# ----------------------------------------------------------------------------
# Offline BN folding, proj/exp pre-multiplication and weight packing (ONE slab)
# ----------------------------------------------------------------------------

def prepare_params(params):
    """Fold eval-mode BN (scale AND bias), pre-multiply the non-residual proj/exp pairs,
    and pack every weight + bias into one [SLAB_ROWS, 128] f32 slab (single DMA)."""
    cfgs = INVERTED_RESIDUAL_SETTING
    fuse = _fusion_flags(cfgs)
    hi = jax.lax.Precision.HIGHEST

    def sc(bn):
        return bn["gamma"] / jnp.sqrt(bn["var"] + BN_EPS)

    def sh(bn, s):
        return bn["beta"] - bn["mean"] * s

    tensors = {}
    s = sc(params["bn0"])
    w0 = (params["conv0_w"] * s).reshape(CONV0_K, FIRST_OUT)
    w0 = jnp.pad(w0, ((0, CONV0_KPAD - CONV0_K), (0, 0)))
    tensors["conv0"] = (w0, sh(params["bn0"], s))

    pending = None          # (W, b) of a projection awaiting fusion into the next expansion
    for i, (c, bp) in enumerate(zip(cfgs, params["blocks"])):
        if "exp_w" in bp:
            s = sc(bp["exp_bn"])
            we, be = bp["exp_w"] * s, sh(bp["exp_bn"], s)
            if pending is not None:
                wp, bpj = pending
                tensors[f"pe{i}"] = (jnp.dot(wp, we, precision=hi),
                                     jnp.dot(bpj, we, precision=hi) + be)
                pending = None
            else:
                tensors[f"exp{i}"] = (we, be)
        s = sc(bp["dw_bn"])
        tensors[f"dw{i}"] = ((bp["dw_w"] * s).reshape(9, c.exp_ch), sh(bp["dw_bn"], s))
        s = sc(bp["proj_bn"])
        wp, bpj = bp["proj_w"] * s, sh(bp["proj_bn"], s)
        if fuse[i]:
            pending = (wp, bpj)
        else:
            tensors[f"proj{i}"] = (wp, bpj)

    s = sc(params["last_bn"])
    wl = jnp.pad(params["last_w"] * s, ((0, 0), (0, C_LAST_PAD - C_LAST)))   # lane-dense
    bl = jnp.pad(sh(params["last_bn"], s), ((0, C_LAST_PAD - C_LAST),))
    tensors["last"] = (wl, bl)

    blocks = []
    for name, k, n in _plan():
        w, b = tensors[name]
        assert w.shape == (k, n) and b.shape == (n,), (name, w.shape, b.shape, k, n)
        kp = -(-k // 8) * 8
        blk = jnp.zeros((kp + 8, SLAB_LANES), jnp.float32)
        blk = blk.at[:k, :n].set(w)
        blk = blk.at[kp, :n].set(b)
        blocks.append(blk)
    return jnp.concatenate(blocks, axis=0)


# ----------------------------------------------------------------------------
# Fused Pallas kernel
# ----------------------------------------------------------------------------

def _hardswish(v):
    return v * jnp.clip(v + 3.0, 0.0, 6.0) * (1.0 / 6.0)


def _apply_act(v, act):
    if act is None:
        return v
    return _hardswish(v) if act else jnp.maximum(v, 0.0)


def _make_mn_kernel(batch, f0, t0):
    """Whole network as one straight-line kernel body.  All shapes / offsets are static
    Python, so the body unrolls into a short sequence of MXU matmuls + VPU/XLU vector ops
    with every intermediate activation vreg/VMEM-resident."""
    ops = _ops()
    meta, _ = _offsets()
    T = t0

    def kernel(x_ref, w_ref, o_ref):
        def dense(h, name, act):
            off, k, n, boff = meta[name]
            w = w_ref[off:off + k, :n]
            b = w_ref[boff:boff + 1, :n]
            return _apply_act(jnp.dot(h, w, preferred_element_type=jnp.float32) + b, act)

        def depthwise(h, f_in, name, sf, act):
            """3x3 depthwise conv, pad 1, stride (sf, 1), on h: [B*f_in*T, C]."""
            off, _, n_ch, boff = meta[name]
            rows = batch * f_in * T
            # whole-tensor time shifts (one XLU roll each).  Rows that crossed a
            # freq-row / batch boundary are neutralized by zeroing the first / last
            # time row of the matching weight tile below (== the conv's time padding).
            xm1 = pltpu.roll(h, 1, axis=0)            # x[..., t-1, :]
            xp1 = pltpu.roll(h, rows - 1, axis=0)     # x[..., t+1, :]
            taps = (xm1, h, xp1)

            w9 = w_ref[off:off + 9, :n_ch]
            bias = w_ref[boff:boff + 1, :n_ch]
            t_row = jax.lax.broadcasted_iota(jnp.int32, (T, n_ch), 0)
            edge = (t_row >= 1, None, t_row <= T - 2)          # per-kw boundary mask
            wtap = []
            for kh in range(3):
                for kw in range(3):
                    wt = jnp.broadcast_to(w9[kh * 3 + kw:kh * 3 + kw + 1, :], (T, n_ch))
                    if edge[kw] is not None:
                        wt = jnp.where(edge[kw], wt, 0.0)      # fold time padding in here
                    wtap.append(wt)

            f_out = (f_in + 2 - 3) // sf + 1
            blocks = []
            for b_i in range(batch):
                for fo in range(f_out):
                    acc = None
                    for kh in range(3):
                        fi = sf * fo + kh - 1
                        if 0 <= fi < f_in:                     # static freq padding
                            r0 = (b_i * f_in + fi) * T
                            for kw in range(3):
                                term = taps[kw][r0:r0 + T, :] * wtap[kh * 3 + kw]
                                acc = term if acc is None else acc + term
                    blocks.append(acc)
            out = blocks[0] if len(blocks) == 1 else jnp.concatenate(blocks, axis=0)
            return _apply_act(out + bias, act), f_out

        h = None
        res = None
        f_cur = f0
        for op in ops:
            if op[0] == "dense":
                _, name, act = op
                src = x_ref[...] if name == "conv0" else h
                h = dense(src, name, act)
            elif op[0] == "dw":
                _, name, sf, act = op
                h, f_cur = depthwise(h, f_cur, name, sf, act)
            elif op[0] == "save_res":
                res = h
            else:  # "add_res"
                h = h + res
        o_ref[...] = h                      # [B*T, 128] lane-dense store

    return kernel


# ----------------------------------------------------------------------------
# Wrapper
# ----------------------------------------------------------------------------

def _im2col_conv0(x_nchw, kernel=3, stride=2, pad=1):
    """Plain-XLA glue: im2col of the stem 3x3/s2 conv so it becomes ONE in-kernel matmul
    with batch folded into the M dimension.  Output: [B*Fo*To, CONV0_KPAD].
    # TODO(synk): doing this tap gather fully in-kernel needs a lane->sublane transpose
    #             of the single-channel [F, T] image; kept as (tiny) wrapper glue."""
    B, Cin, F, T = x_nchw.shape
    x = jnp.transpose(x_nchw, (0, 2, 3, 1)).astype(jnp.float32)       # [B, F, T, Cin]
    xp = jnp.pad(x, ((0, 0), (pad, pad), (pad, pad), (0, 0)))
    Fo = (F + 2 * pad - kernel) // stride + 1
    To = (T + 2 * pad - kernel) // stride + 1
    cols = []
    for kh in range(kernel):
        for kw in range(kernel):
            cols.append(jax.lax.slice(
                xp, (0, kh, kw, 0),
                (B, kh + stride * (Fo - 1) + 1, kw + stride * (To - 1) + 1, Cin),
                (1, stride, stride, 1)))
    k0 = kernel * kernel * Cin
    cols = jnp.concatenate(cols, axis=-1).reshape(B * Fo * To, k0)
    cols = jnp.pad(cols, ((0, 0), (0, CONV0_KPAD - k0)))
    return cols, Fo, To


def mn_forward(slab, x_nchw):
    """Fused MN forward.  `slab` comes from prepare_params(init_params(key))."""
    cfgs = INVERTED_RESIDUAL_SETTING
    assert all(c.kernel == 3 and c.stride[1] == 1 for c in cfgs)

    B = x_nchw.shape[0]
    x0, f0, t0 = _im2col_conv0(x_nchw)

    # static check: freq dim must collapse to 1 (matches the PyTorch squeeze(2))
    f = f0
    for c in cfgs:
        f = (f + 2 - c.kernel) // c.stride[0] + 1
    assert f == 1, f

    _, slab_rows = _offsets()
    assert slab.shape == (slab_rows, SLAB_LANES), slab.shape

    rows_in = B * f0 * t0
    rows_out = B * t0
    # Single grid step: batch is folded into the matmul M dimension, so no per-batch
    # grid overhead.  (For large B, block over batch with grid=(B//BB,) instead.)
    out = pl.pallas_call(
        _make_mn_kernel(B, f0, t0),
        out_shape=jax.ShapeDtypeStruct((rows_out, C_LAST_PAD), jnp.float32),
        grid=(1,),
        in_specs=[pl.BlockSpec((rows_in, CONV0_KPAD), lambda i: (0, 0)),
                  pl.BlockSpec((slab_rows, SLAB_LANES), lambda i: (0, 0))],
        out_specs=pl.BlockSpec((rows_out, C_LAST_PAD), lambda i: (0, 0)),
        compiler_params=pltpu.CompilerParams(dimension_semantics=("arbitrary",)),
    )(x0, slab)
    return out.reshape(B, t0, C_LAST_PAD)[:, :, :C_LAST]


# ----------------------------------------------------------------------------
# Pure-JAX (XLA) reference for validation
# ----------------------------------------------------------------------------

def mn_forward_ref(params, x_nchw):
    """Plain-XLA reference of the same forward, built from the RAW (unfolded) params."""
    def bn(v, p):
        s = p["gamma"] / jnp.sqrt(p["var"] + BN_EPS)
        return (v - p["mean"]) * s + p["beta"]

    dn = ("NHWC", "HWIO", "NHWC")
    hi = jax.lax.Precision.HIGHEST
    x = jnp.transpose(x_nchw, (0, 2, 3, 1)).astype(jnp.float32)
    x = jax.lax.conv_general_dilated(x, params["conv0_w"], (2, 2), ((1, 1), (1, 1)),
                                     dimension_numbers=dn, precision=hi)
    x = _hardswish(bn(x, params["bn0"]))
    for c, bp in zip(INVERTED_RESIDUAL_SETTING, params["blocks"]):
        res = x if (c.stride == (1, 1) and c.in_ch == c.out_ch) else None
        h = x
        if "exp_w" in bp:
            h = _apply_act(bn(jnp.einsum("bftc,cd->bftd", h, bp["exp_w"], precision=hi),
                              bp["exp_bn"]), c.use_hs)
        dw = bp["dw_w"].reshape(c.kernel, c.kernel, 1, c.exp_ch)
        h = jax.lax.conv_general_dilated(h, dw, c.stride, ((1, 1), (1, 1)),
                                         dimension_numbers=dn,
                                         feature_group_count=c.exp_ch, precision=hi)
        h = _apply_act(bn(h, bp["dw_bn"]), c.use_hs)
        h = bn(jnp.einsum("bftc,cd->bftd", h, bp["proj_w"], precision=hi), bp["proj_bn"])
        x = h + res if res is not None else h
    x = _hardswish(bn(jnp.einsum("bftc,cd->bftd", x, params["last_w"], precision=hi),
                      params["last_bn"]))
    return jnp.squeeze(x, axis=1)        # NHWC [B,1,T,C] -> [B,T,C] == squeeze(2).permute(0,2,1)


# ----------------------------------------------------------------------------
# Main
# ----------------------------------------------------------------------------

if __name__ == "__main__":
    key = jax.random.PRNGKey(0)
    k_params, k_x = jax.random.split(key)

    params = init_params(k_params)
    slab = prepare_params(params)

    # Input in PyTorch NCHW convention: [B=2, C_in=1, F=16, T=16]
    x = jax.random.normal(k_x, (2, 1, 16, 16), dtype=jnp.float32)

    out = jax.jit(mn_forward)(slab, x)
    out = jax.block_until_ready(out)

    assert out.shape == (2, 8, C_LAST), out.shape
    assert bool(jnp.isfinite(out).all())

    # correctness: fused Pallas kernel vs. plain-XLA reference (loose tol for MXU rounding)
    ref = mn_forward_ref(params, x)
    err = float(jnp.max(jnp.abs(out - ref)))
    assert err < 5e-2, f"max |pallas - ref| = {err}"

    print("KERNEL_OK")
</pallas_src>

<mosaic_0001>
module attributes {stable_mosaic.version = 11 : i64} {
  func.func @kernel(%arg0: i32, %arg1: memref<128x16xf32, #tpu.memory_space<vmem>>, %arg2: memref<344x128xf32, #tpu.memory_space<vmem>>, %arg3: memref<16x128xf32, #tpu.memory_space<vmem>>) attributes {dimension_semantics = [#tpu.dimension_semantics<arbitrary>], iteration_bounds = array<i64: 1>, scalar_prefetch = 0 : i64, scratch_operands = 0 : i64, tpu.core_type = #tpu.core_type<tc>, window_params = [{pipeline_mode = #tpu.pipeline_mode<synchronous>, transform_indices = @transform_0, window_bounds = array<i64: 128, 16>}, {pipeline_mode = #tpu.pipeline_mode<synchronous>, transform_indices = @transform_1, window_bounds = array<i64: 344, 128>}, {pipeline_mode = #tpu.pipeline_mode<synchronous>, transform_indices = @transform_2, window_bounds = array<i64: 16, 128>}]} {
    %c0 = arith.constant 0 : index
    %c0_0 = arith.constant 0 : index
    %0 = vector.load %arg1[%c0, %c0_0] : memref<128x16xf32, #tpu.memory_space<vmem>>, vector<128x16xf32>
    %c0_1 = arith.constant 0 : index
    %c0_2 = arith.constant 0 : index
    %1 = vector.load %arg2[%c0_1, %c0_2] : memref<344x128xf32, #tpu.memory_space<vmem>>, vector<16x8xf32>
    %c16 = arith.constant 16 : index
    %c0_3 = arith.constant 0 : index
    %2 = vector.load %arg2[%c16, %c0_3] : memref<344x128xf32, #tpu.memory_space<vmem>>, vector<1x8xf32>
    %cst = arith.constant dense<0.000000e+00> : vector<128x8xf32>
    %3 = tpu.matmul %0, %1, %cst {dimension_numbers = #tpu.dot_dimension_numbers<[1], [0], [0], [1], [0, 0, 1, 1], [], []>} : vector<128x16xf32>, vector<16x8xf32>, vector<128x8xf32> -> vector<128x8xf32>
    %4 = vector.broadcast %2 : vector<1x8xf32> to vector<128x8xf32>
    %5 = arith.addf %3, %4 : vector<128x8xf32>
    %cst_4 = arith.constant 3.000000e+00 : f32
    %6 = vector.broadcast %cst_4 : f32 to vector<128x8xf32>
    %7 = arith.addf %5, %6 : vector<128x8xf32>
    %cst_5 = arith.constant 0.000000e+00 : f32
    %cst_6 = arith.constant 6.000000e+00 : f32
    %8 = vector.broadcast %cst_5 : f32 to vector<128x8xf32>
    %9 = arith.maximumf %8, %7 : vector<128x8xf32>
    %10 = vector.broadcast %cst_6 : f32 to vector<128x8xf32>
    %11 = arith.minimumf %10, %9 : vector<128x8xf32>
    %12 = arith.mulf %5, %11 : vector<128x8xf32>
    %cst_7 = arith.constant 0.166666672 : f32
    %13 = vector.broadcast %cst_7 : f32 to vector<128x8xf32>
    %14 = arith.mulf %12, %13 : vector<128x8xf32>
    %c24 = arith.constant 24 : index
    %c0_8 = arith.constant 0 : index
    %15 = vector.load %arg2[%c24, %c0_8] : memref<344x128xf32, #tpu.memory_space<vmem>>, vector<8x16xf32>
    %c32 = arith.constant 32 : index
    %c0_9 = arith.constant 0 : index
    %16 = vector.load %arg2[%c32, %c0_9] : memref<344x128xf32, #tpu.memory_space<vmem>>, vector<1x16xf32>
    %cst_10 = arith.constant dense<0.000000e+00> : vector<128x16xf32>
    %17 = tpu.matmul %14, %15, %cst_10 {dimension_numbers = #tpu.dot_dimension_numbers<[1], [0], [0], [1], [0, 0, 1, 1], [], []>} : vector<128x8xf32>, vector<8x16xf32>, vector<128x16xf32> -> vector<128x16xf32>
    %18 = vector.broadcast %16 : vector<1x16xf32> to vector<128x16xf32>
    %19 = arith.addf %17, %18 : vector<128x16xf32>
    %cst_11 = arith.constant 3.000000e+00 : f32
    %20 = vector.broadcast %cst_11 : f32 to vector<128x16xf32>
    %21 = arith.addf %19, %20 : vector<128x16xf32>
    %cst_12 = arith.constant 0.000000e+00 : f32
    %cst_13 = arith.constant 6.000000e+00 : f32
    %22 = vector.broadcast %cst_12 : f32 to vector<128x16xf32>
    %23 = arith.maximumf %22, %21 : vector<128x16xf32>
    %24 = vector.broadcast %cst_13 : f32 to vector<128x16xf32>
    %25 = arith.minimumf %24, %23 : vector<128x16xf32>
    %26 = arith.mulf %19, %25 : vector<128x16xf32>
    %cst_14 = arith.constant 0.166666672 : f32
    %27 = vector.broadcast %cst_14 : f32 to vector<128x16xf32>
    %28 = arith.mulf %26, %27 : vector<128x16xf32>
    %c1_i32 = arith.constant 1 : i32
    %29 = tpu.dynamic_rotate %28 by %c1_i32 dim 0 : vector<128x16xf32>, i32 -> vector<128x16xf32>
    %c127_i32 = arith.constant 127 : i32
    %30 = tpu.dynamic_rotate %28 by %c127_i32 dim 0 : vector<128x16xf32>, i32 -> vector<128x16xf32>
    %c40 = arith.constant 40 : index
    %c0_15 = arith.constant 0 : index
    %31 = vector.load %arg2[%c40, %c0_15] : memref<344x128xf32, #tpu.memory_space<vmem>>, vector<9x16xf32>
    %c56 = arith.constant 56 : index
    %c0_16 = arith.constant 0 : index
    %32 = vector.load %arg2[%c56, %c0_16] : memref<344x128xf32, #tpu.memory_space<vmem>>, vector<1x16xf32>
    %33 = tpu.iota {dimensions = array<i32: 0>} : vector<8x16xi32>
    %c1_i32_17 = arith.constant 1 : i32
    %34 = vector.broadcast %c1_i32_17 : i32 to vector<8x16xi32>
    %35 = arith.cmpi sge, %33, %34 : vector<8x16xi32>
    %c6_i32 = arith.constant 6 : i32
    %36 = vector.broadcast %c6_i32 : i32 to vector<8x16xi32>
    %37 = arith.cmpi sle, %33, %36 : vector<8x16xi32>
    %38 = vector.extract_strided_slice %31 {offsets = [0, 0], sizes = [1, 16], strides = [1, 1]} : vector<9x16xf32> to vector<1x16xf32>
    %39 = vector.shape_cast %38 : vector<1x16xf32> to vector<1x16xf32>
    %40 = vector.broadcast %39 : vector<1x16xf32> to vector<8x16xf32>
    %cst_18 = arith.constant 0.000000e+00 : f32
    %41 = vector.broadcast %cst_18 : f32 to vector<8x16xf32>
    %42 = arith.select %35, %40, %41 : vector<8x16xi1>, vector<8x16xf32>
    %43 = vector.extract_strided_slice %31 {offsets = [1, 0], sizes = [1, 16], strides = [1, 1]} : vector<9x16xf32> to vector<1x16xf32>
    %44 = vector.shape_cast %43 : vector<1x16xf32> to vector<1x16xf32>
    %45 = vector.broadcast %44 : vector<1x16xf32> to vector<8x16xf32>
    %46 = vector.extract_strided_slice %31 {offsets = [2, 0], sizes = [1, 16], strides = [1, 1]} : vector<9x16xf32> to vector<1x16xf32>
    %47 = vector.shape_cast %46 : vector<1x16xf32> to vector<1x16xf32>
    %48 = vector.broadcast %47 : vector<1x16xf32> to vector<8x16xf32>
    %cst_19 = arith.constant 0.000000e+00 : f32
    %49 = vector.broadcast %cst_19 : f32 to vector<8x16xf32>
    %50 = arith.select %37, %48, %49 : vector<8x16xi1>, vector<8x16xf32>
    %51 = vector.extract_strided_slice %31 {offsets = [3, 0], sizes = [1, 16], strides = [1, 1]} : vector<9x16xf32> to vector<1x16xf32>
    %52 = vector.shape_cast %51 : vector<1x16xf32> to vector<1x16xf32>
    %53 = vector.broadcast %52 : vector<1x16xf32> to vector<8x16xf32>
    %cst_20 = arith.constant 0.000000e+00 : f32
    %54 = vector.broadcast %cst_20 : f32 to vector<8x16xf32>
    %55 = arith.select %35, %53, %54 : vector<8x16xi1>, vector<8x16xf32>
    %56 = vector.extract_strided_slice %31 {offsets = [4, 0], sizes = [1, 16], strides = [1, 1]} : vector<9x16xf32> to vector<1x16xf32>
    %57 = vector.shape_cast %56 : vector<1x16xf32> to vector<1x16xf32>
    %58 = vector.broadcast %57 : vector<1x16xf32> to vector<8x16xf32>
    %59 = vector.extract_strided_slice %31 {offsets = [5, 0], sizes = [1, 16], strides = [1, 1]} : vector<9x16xf32> to vector<1x16xf32>
    %60 = vector.shape_cast %59 : vector<1x16xf32> to vector<1x16xf32>
    %61 = vector.broadcast %60 : vector<1x16xf32> to vector<8x16xf32>
    %cst_21 = arith.constant 0.000000e+00 : f32
    %62 = vector.broadcast %cst_21 : f32 to vector<8x16xf32>
    %63 = arith.select %37, %61, %62 : vector<8x16xi1>, vector<8x16xf32>
    %64 = vector.extract_strided_slice %31 {offsets = [6, 0], sizes = [1, 16], strides = [1, 1]} : vector<9x16xf32> to vector<1x16xf32>
    %65 = vector.shape_cast %64 : vector<1x16xf32> to vector<1x16xf32>
    %66 = vector.broadcast %65 : vector<1x16xf32> to vector<8x16xf32>
    %cst_22 = arith.constant 0.000000e+00 : f32
    %67 = vector.broadcast %cst_22 : f32 to vector<8x16xf32>
    %68 = arith.select %35, %66, %67 : vector<8x16xi1>, vector<8x16xf32>
    %69 = vector.extract_strided_slice %31 {offsets = [7, 0], sizes = [1, 16], strides = [1, 1]} : vector<9x16xf32> to vector<1x16xf32>
    %70 = vector.shape_cast %69 : vector<1x16xf32> to vector<1x16xf32>
    %71 = vector.broadcast %70 : vector<1x16xf32> to vector<8x16xf32>
    %72 = vector.extract_strided_slice %31 {offsets = [8, 0], sizes = [1, 16], strides = [1, 1]} : vector<9x16xf32> to vector<1x16xf32>
    %73 = vector.shape_cast %72 : vector<1x16xf32> to vector<1x16xf32>
    %74 = vector.broadcast %73 : vector<1x16xf32> to vector<8x16xf32>
    %cst_23 = arith.constant 0.000000e+00 : f32
    %75 = vector.broadcast %cst_23 : f32 to vector<8x16xf32>
    %76 = arith.select %37, %74, %75 : vector<8x16xi1>, vector<8x16xf32>
    %77 = vector.extract_strided_slice %29 {offsets = [0, 0], sizes = [8, 16], strides = [1, 1]} : vector<128x16xf32> to vector<8x16xf32>
    %78 = arith.mulf %77, %55 : vector<8x16xf32>
    %79 = vector.extract_strided_slice %28 {offsets = [0, 0], sizes = [8, 16], strides = [1, 1]} : vector<128x16xf32> to vector<8x16xf32>
    %80 = arith.mulf %79, %58 : vector<8x16xf32>
    %81 = arith.addf %78, %80 : vector<8x16xf32>
    %82 = vector.extract_strided_slice %30 {offsets = [0, 0], sizes = [8, 16], strides = [1, 1]} : vector<128x16xf32> to vector<8x16xf32>
    %83 = arith.mulf %82, %63 : vector<8x16xf32>
    %84 = arith.addf %81, %83 : vector<8x16xf32>
    %85 = vector.extract_strided_slice %29 {offsets = [8, 0], sizes = [8, 16], strides = [1, 1]} : vector<128x16xf32> to vector<8x16xf32>
    %86 = arith.mulf %85, %68 : vector<8x16xf32>
    %87 = arith.addf %84, %86 : vector<8x16xf32>
    %88 = vector.extract_strided_slice %28 {offsets = [8, 0], sizes = [8, 16], strides = [1, 1]} : vector<128x16xf32> to vector<8x16xf32>
    %89 = arith.mulf %88, %71 : vector<8x16xf32>
    %90 = arith.addf %87, %89 : vector<8x16xf32>
    %91 = vector.extract_strided_slice %30 {offsets = [8, 0], sizes = [8, 16], strides = [1, 1]} : vector<128x16xf32> to vector<8x16xf32>
    %92 = arith.mulf %91, %76 : vector<8x16xf32>
    %93 = arith.addf %90, %92 : vector<8x16xf32>
    %94 = vector.extract_strided_slice %29 {offsets = [8, 0], sizes = [8, 16], strides = [1, 1]} : vector<128x16xf32> to vector<8x16xf32>
    %95 = arith.mulf %94, %42 : vector<8x16xf32>
    %96 = vector.extract_strided_slice %28 {offsets = [8, 0], sizes = [8, 16], strides = [1, 1]} : vector<128x16xf32> to vector<8x16xf32>
    %97 = arith.mulf %96, %45 : vector<8x16xf32>
    %98 = arith.addf %95, %97 : vector<8x16xf32>
    %99 = vector.extract_strided_slice %30 {offsets = [8, 0], sizes = [8, 16], strides = [1, 1]} : vector<128x16xf32> to vector<8x16xf32>
    %100 = arith.mulf %99, %50 : vector<8x16xf32>
    %101 = arith.addf %98, %100 : vector<8x16xf32>
    %102 = vector.extract_strided_slice %29 {offsets = [16, 0], sizes = [8, 16], strides = [1, 1]} : vector<128x16xf32> to vector<8x16xf32>
    %103 = arith.mulf %102, %55 : vector<8x16xf32>
    %104 = arith.addf %101, %103 : vector<8x16xf32>
    %105 = vector.extract_strided_slice %28 {offsets = [16, 0], sizes = [8, 16], strides = [1, 1]} : vector<128x16xf32> to vector<8x16xf32>
    %106 = arith.mulf %105, %58 : vector<8x16xf32>
    %107 = arith.addf %104, %106 : vector<8x16xf32>
    %108 = vector.extract_strided_slice %30 {offsets = [16, 0], sizes = [8, 16], strides = [1, 1]} : vector<128x16xf32> to vector<8x16xf32>
    %109 = arith.mulf %108, %63 : vector<8x16xf32>
    %110 = arith.addf %107, %109 : vector<8x16xf32>
    %111 = vector.extract_strided_slice %29 {offsets = [24, 0], sizes = [8, 16], strides = [1, 1]} : vector<128x16xf32> to vector<8x16xf32>
    %112 = arith.mulf %111, %68 : vector<8x16xf32>
    %113 = arith.addf %110, %112 : vector<8x16xf32>
    %114 = vector.extract_strided_slice %28 {offsets = [24, 0], sizes = [8, 16], strides = [1, 1]} : vector<128x16xf32> to vector<8x16xf32>
    %115 = arith.mulf %114, %71 : vector<8x16xf32>
    %116 = arith.addf %113, %115 : vector<8x16xf32>
    %117 = vector.extract_strided_slice %30 {offsets = [24, 0], sizes = [8, 16], strides = [1, 1]} : vector<128x16xf32> to vector<8x16xf32>
    %118 = arith.mulf %117, %76 : vector<8x16xf32>
    %119 = arith.addf %116, %118 : vector<8x16xf32>
    %120 = vector.extract_strided_slice %29 {offsets = [24, 0], sizes = [8, 16], strides = [1, 1]} : vector<128x16xf32> to vector<8x16xf32>
    %121 = arith.mulf %120, %42 : vector<8x16xf32>
    %122 = vector.extract_strided_slice %28 {offsets = [24, 0], sizes = [8, 16], strides = [1, 1]} : vector<128x16xf32> to vector<8x16xf32>
    %123 = arith.mulf %122, %45 : vector<8x16xf32>
    %124 = arith.addf %121, %123 : vector<8x16xf32>
    %125 = vector.extract_strided_slice %30 {offsets = [24, 0], sizes = [8, 16], strides = [1, 1]} : vector<128x16xf32> to vector<8x16xf32>
    %126 = arith.mulf %125, %50 : vector<8x16xf32>
    %127 = arith.addf %124, %126 : vector<8x16xf32>
    %128 = vector.extract_strided_slice %29 {offsets = [32, 0], sizes = [8, 16], strides = [1, 1]} : vector<128x16xf32> to vector<8x16xf32>
    %129 = arith.mulf %128, %55 : vector<8x16xf32>
    %130 = arith.addf %127, %129 : vector<8x16xf32>
    %131 = vector.extract_strided_slice %28 {offsets = [32, 0], sizes = [8, 16], strides = [1, 1]} : vector<128x16xf32> to vector<8x16xf32>
    %132 = arith.mulf %131, %58 : vector<8x16xf32>
    %133 = arith.addf %130, %132 : vector<8x16xf32>
    %134 = vector.extract_strided_slice %30 {offsets = [32, 0], sizes = [8, 16], strides = [1, 1]} : vector<128x16xf32> to vector<8x16xf32>
    %135 = arith.mulf %134, %63 : vector<8x16xf32>
    %136 = arith.addf %133, %135 : vector<8x16xf32>
    %137 = vector.extract_strided_slice %29 {offsets = [40, 0], sizes = [8, 16], strides = [1, 1]} : vector<128x16xf32> to vector<8x16xf32>
    %138 = arith.mulf %137, %68 : vector<8x16xf32>
    %139 = arith.addf %136, %138 : vector<8x16xf32>
    %140 = vector.extract_strided_slice %28 {offsets = [40, 0], sizes = [8, 16], strides = [1, 1]} : vector<128x16xf32> to vector<8x16xf32>
    %141 = arith.mulf %140, %71 : vector<8x16xf32>
    %142 = arith.addf %139, %141 : vector<8x16xf32>
    %143 = vector.extract_strided_slice %30 {offsets = [40, 0], sizes = [8, 16], strides = [1, 1]} : vector<128x16xf32> to vector<8x16xf32>
    %144 = arith.mulf %143, %76 : vector<8x16xf32>
    %145 = arith.addf %142, %144 : vector<8x16xf32>
    %146 = vector.extract_strided_slice %29 {offsets = [40, 0], sizes = [8, 16], strides = [1, 1]} : vector<128x16xf32> to vector<8x16xf32>
    %147 = arith.mulf %146, %42 : vector<8x16xf32>
    %148 = vector.extract_strided_slice %28 {offsets = [40, 0], sizes = [8, 16], strides = [1, 1]} : vector<128x16xf32> to vector<8x16xf32>
    %149 = arith.mulf %148, %45 : vector<8x16xf32>
    %150 = arith.addf %147, %149 : vector<8x16xf32>
    %151 = vector.extract_strided_slice %30 {offsets = [40, 0], sizes = [8, 16], strides = [1, 1]} : vector<128x16xf32> to vector<8x16xf32>
    %152 = arith.mulf %151, %50 : vector<8x16xf32>
    %153 = arith.addf %150, %152 : vector<8x16xf32>
    %154 = vector.extract_strided_slice %29 {offsets = [48, 0], sizes = [8, 16], strides = [1, 1]} : vector<128x16xf32> to vector<8x16xf32>
    %155 = arith.mulf %154, %55 : vector<8x16xf32>
    %156 = arith.addf %153, %155 : vector<8x16xf32>
    %157 = vector.extract_strided_slice %28 {offsets = [48, 0], sizes = [8, 16], strides = [1, 1]} : vector<128x16xf32> to vector<8x16xf32>
    %158 = arith.mulf %157, %58 : vector<8x16xf32>
    %159 = arith.addf %156, %158 : vector<8x16xf32>
    %160 = vector.extract_strided_slice %30 {offsets = [48, 0], sizes = [8, 16], strides = [1, 1]} : vector<128x16xf32> to vector<8x16xf32>
    %161 = arith.mulf %160, %63 : vector<8x16xf32>
    %162 = arith.addf %159, %161 : vector<8x16xf32>
    %163 = vector.extract_strided_slice %29 {offsets = [56, 0], sizes = [8, 16], strides = [1, 1]} : vector<128x16xf32> to vector<8x16xf32>
    %164 = arith.mulf %163, %68 : vector<8x16xf32>
    %165 = arith.addf %162, %164 : vector<8x16xf32>
    %166 = vector.extract_strided_slice %28 {offsets = [56, 0], sizes = [8, 16], strides = [1, 1]} : vector<128x16xf32> to vector<8x16xf32>
    %167 = arith.mulf %166, %71 : vector<8x16xf32>
    %168 = arith.addf %165, %167 : vector<8x16xf32>
    %169 = vector.extract_strided_slice %30 {offsets = [56, 0], sizes = [8, 16], strides = [1, 1]} : vector<128x16xf32> to vector<8x16xf32>
    %170 = arith.mulf %169, %76 : vector<8x16xf32>
    %171 = arith.addf %168, %170 : vector<8x16xf32>
    %172 = vector.extract_strided_slice %29 {offsets = [64, 0], sizes = [8, 16], strides = [1, 1]} : vector<128x16xf32> to vector<8x16xf32>
    %173 = arith.mulf %172, %55 : vector<8x16xf32>
    %174 = vector.extract_strided_slice %28 {offsets = [64, 0], sizes = [8, 16], strides = [1, 1]} : vector<128x16xf32> to vector<8x16xf32>
    %175 = arith.mulf %174, %58 : vector<8x16xf32>
    %176 = arith.addf %173, %175 : vector<8x16xf32>
    %177 = vector.extract_strided_slice %30 {offsets = [64, 0], sizes = [8, 16], strides = [1, 1]} : vector<128x16xf32> to vector<8x16xf32>
    %178 = arith.mulf %177, %63 : vector<8x16xf32>
    %179 = arith.addf %176, %178 : vector<8x16xf32>
    %180 = vector.extract_strided_slice %29 {offsets = [72, 0], sizes = [8, 16], strides = [1, 1]} : vector<128x16xf32> to vector<8x16xf32>
    %181 = arith.mulf %180, %68 : vector<8x16xf32>
    %182 = arith.addf %179, %181 : vector<8x16xf32>
    %183 = vector.extract_strided_slice %28 {offsets = [72, 0], sizes = [8, 16], strides = [1, 1]} : vector<128x16xf32> to vector<8x16xf32>
    %184 = arith.mulf %183, %71 : vector<8x16xf32>
    %185 = arith.addf %182, %184 : vector<8x16xf32>
    %186 = vector.extract_strided_slice %30 {offsets = [72, 0], sizes = [8, 16], strides = [1, 1]} : vector<128x16xf32> to vector<8x16xf32>
    %187 = arith.mulf %186, %76 : vector<8x16xf32>
    %188 = arith.addf %185, %187 : vector<8x16xf32>
    %189 = vector.extract_strided_slice %29 {offsets = [72, 0], sizes = [8, 16], strides = [1, 1]} : vector<128x16xf32> to vector<8x16xf32>
    %190 = arith.mulf %189, %42 : vector<8x16xf32>
    %191 = vector.extract_strided_slice %28 {offsets = [72, 0], sizes = [8, 16], strides = [1, 1]} : vector<128x16xf32> to vector<8x16xf32>
    %192 = arith.mulf %191, %45 : vector<8x16xf32>
    %193 = arith.addf %190, %192 : vector<8x16xf32>
    %194 = vector.extract_strided_slice %30 {offsets = [72, 0], sizes = [8, 16], strides = [1, 1]} : vector<128x16xf32> to vector<8x16xf32>
    %195 = arith.mulf %194, %50 : vector<8x16xf32>
    %196 = arith.addf %193, %195 : vector<8x16xf32>
    %197 = vector.extract_strided_slice %29 {offsets = [80, 0], sizes = [8, 16], strides = [1, 1]} : vector<128x16xf32> to vector<8x16xf32>
    %198 = arith.mulf %197, %55 : vector<8x16xf32>
    %199 = arith.addf %196, %198 : vector<8x16xf32>
    %200 = vector.extract_strided_slice %28 {offsets = [80, 0], sizes = [8, 16], strides = [1, 1]} : vector<128x16xf32> to vector<8x16xf32>
    %201 = arith.mulf %200, %58 : vector<8x16xf32>
    %202 = arith.addf %199, %201 : vector<8x16xf32>
    %203 = vector.extract_strided_slice %30 {offsets = [80, 0], sizes = [8, 16], strides = [1, 1]} : vector<128x16xf32> to vector<8x16xf32>
    %204 = arith.mulf %203, %63 : vector<8x16xf32>
    %205 = arith.addf %202, %204 : vector<8x16xf32>
    %206 = vector.extract_strided_slice %29 {offsets = [88, 0], sizes = [8, 16], strides = [1, 1]} : vector<128x16xf32> to vector<8x16xf32>
    %207 = arith.mulf %206, %68 : vector<8x16xf32>
    %208 = arith.addf %205, %207 : vector<8x16xf32>
    %209 = vector.extract_strided_slice %28 {offsets = [88, 0], sizes = [8, 16], strides = [1, 1]} : vector<128x16xf32> to vector<8x16xf32>
    %210 = arith.mulf %209, %71 : vector<8x16xf32>
    %211 = arith.addf %208, %210 : vector<8x16xf32>
    %212 = vector.extract_strided_slice %30 {offsets = [88, 0], sizes = [8, 16], strides = [1, 1]} : vector<128x16xf32> to vector<8x16xf32>
    %213 = arith.mulf %212, %76 : vector<8x16xf32>
    %214 = arith.addf %211, %213 : vector<8x16xf32>
    %215 = vector.extract_strided_slice %29 {offsets = [88, 0], sizes = [8, 16], strides = [1, 1]} : vector<128x16xf32> to vector<8x16xf32>
    %216 = arith.mulf %215, %42 : vector<8x16xf32>
    %217 = vector.extract_strided_slice %28 {offsets = [88, 0], sizes = [8, 16], strides = [1, 1]} : vector<128x16xf32> to vector<8x16xf32>
    %218 = arith.mulf %217, %45 : vector<8x16xf32>
    %219 = arith.addf %216, %218 : vector<8x16xf32>
    %220 = vector.extract_strided_slice %30 {offsets = [88, 0], sizes = [8, 16], strides = [1, 1]} : vector<128x16xf32> to vector<8x16xf32>
    %221 = arith.mulf %220, %50 : vector<8x16xf32>
    %222 = arith.addf %219, %221 : vector<8x16xf32>
    %223 = vector.extract_strided_slice %29 {offsets = [96, 0], sizes = [8, 16], strides = [1, 1]} : vector<128x16xf32> to vector<8x16xf32>
    %224 = arith.mulf %223, %55 : vector<8x16xf32>
    %225 = arith.addf %222, %224 : vector<8x16xf32>
    %226 = vector.extract_strided_slice %28 {offsets = [96, 0], sizes = [8, 16], strides = [1, 1]} : vector<128x16xf32> to vector<8x16xf32>
    %227 = arith.mulf %226, %58 : vector<8x16xf32>
    %228 = arith.addf %225, %227 : vector<8x16xf32>
    %229 = vector.extract_strided_slice %30 {offsets = [96, 0], sizes = [8, 16], strides = [1, 1]} : vector<128x16xf32> to vector<8x16xf32>
    %230 = arith.mulf %229, %63 : vector<8x16xf32>
    %231 = arith.addf %228, %230 : vector<8x16xf32>
    %232 = vector.extract_strided_slice %29 {offsets = [104, 0], sizes = [8, 16], strides = [1, 1]} : vector<128x16xf32> to vector<8x16xf32>
    %233 = arith.mulf %232, %68 : vector<8x16xf32>
    %234 = arith.addf %231, %233 : vector<8x16xf32>
    %235 = vector.extract_strided_slice %28 {offsets = [104, 0], sizes = [8, 16], strides = [1, 1]} : vector<128x16xf32> to vector<8x16xf32>
    %236 = arith.mulf %235, %71 : vector<8x16xf32>
    %237 = arith.addf %234, %236 : vector<8x16xf32>
    %238 = vector.extract_strided_slice %30 {offsets = [104, 0], sizes = [8, 16], strides = [1, 1]} : vector<128x16xf32> to vector<8x16xf32>
    %239 = arith.mulf %238, %76 : vector<8x16xf32>
    %240 = arith.addf %237, %239 : vector<8x16xf32>
    %241 = vector.extract_strided_slice %29 {offsets = [104, 0], sizes = [8, 16], strides = [1, 1]} : vector<128x16xf32> to vector<8x16xf32>
    %242 = arith.mulf %241, %42 : vector<8x16xf32>
    %243 = vector.extract_strided_slice %28 {offsets = [104, 0], sizes = [8, 16], strides = [1, 1]} : vector<128x16xf32> to vector<8x16xf32>
    %244 = arith.mulf %243, %45 : vector<8x16xf32>
    %245 = arith.addf %242, %244 : vector<8x16xf32>
    %246 = vector.extract_strided_slice %30 {offsets = [104, 0], sizes = [8, 16], strides = [1, 1]} : vector<128x16xf32> to vector<8x16xf32>
    %247 = arith.mulf %246, %50 : vector<8x16xf32>
    %248 = arith.addf %245, %247 : vector<8x16xf32>
    %249 = vector.extract_strided_slice %29 {offsets = [112, 0], sizes = [8, 16], strides = [1, 1]} : vector<128x16xf32> to vector<8x16xf32>
    %250 = arith.mulf %249, %55 : vector<8x16xf32>
    %251 = arith.addf %248, %250 : vector<8x16xf32>
    %252 = vector.extract_strided_slice %28 {offsets = [112, 0], sizes = [8, 16], strides = [1, 1]} : vector<128x16xf32> to vector<8x16xf32>
    %253 = arith.mulf %252, %58 : vector<8x16xf32>
    %254 = arith.addf %251, %253 : vector<8x16xf32>
    %255 = vector.extract_strided_slice %30 {offsets = [112, 0], sizes = [8, 16], strides = [1, 1]} : vector<128x16xf32> to vector<8x16xf32>
    %256 = arith.mulf %255, %63 : vector<8x16xf32>
    %257 = arith.addf %254, %256 : vector<8x16xf32>
    %258 = vector.extract_strided_slice %29 {offsets = [120, 0], sizes = [8, 16], strides = [1, 1]} : vector<128x16xf32> to vector<8x16xf32>
    %259 = arith.mulf %258, %68 : vector<8x16xf32>
    %260 = arith.addf %257, %259 : vector<8x16xf32>
    %261 = vector.extract_strided_slice %28 {offsets = [120, 0], sizes = [8, 16], strides = [1, 1]} : vector<128x16xf32> to vector<8x16xf32>
    %262 = arith.mulf %261, %71 : vector<8x16xf32>
    %263 = arith.addf %260, %262 : vector<8x16xf32>
    %264 = vector.extract_strided_slice %30 {offsets = [120, 0], sizes = [8, 16], strides = [1, 1]} : vector<128x16xf32> to vector<8x16xf32>
    %265 = arith.mulf %264, %76 : vector<8x16xf32>
    %266 = arith.addf %263, %265 : vector<8x16xf32>
    %267 = tpu.concatenate %93, %119, %145, %171, %188, %214, %240, %266 in 0 : vector<8x16xf32>, vector<8x16xf32>, vector<8x16xf32>, vector<8x16xf32>, vector<8x16xf32>, vector<8x16xf32>, vector<8x16xf32>, vector<8x16xf32> -> vector<64x16xf32>
    %268 = vector.broadcast %32 : vector<1x16xf32> to vector<64x16xf32>
    %269 = arith.addf %267, %268 : vector<64x16xf32>
    %cst_24 = arith.constant 3.000000e+00 : f32
    %270 = vector.broadcast %cst_24 : f32 to vector<64x16xf32>
    %271 = arith.addf %269, %270 : vector<64x16xf32>
    %cst_25 = arith.constant 0.000000e+00 : f32
    %cst_26 = arith.constant 6.000000e+00 : f32
    %272 = vector.broadcast %cst_25 : f32 to vector<64x16xf32>
    %273 = arith.maximumf %272, %271 : vector<64x16xf32>
    %274 = vector.broadcast %cst_26 : f32 to vector<64x16xf32>
    %275 = arith.minimumf %274, %273 : vector<64x16xf32>
    %276 = arith.mulf %269, %275 : vector<64x16xf32>
    %cst_27 = arith.constant 0.166666672 : f32
    %277 = vector.broadcast %cst_27 : f32 to vector<64x16xf32>
    %278 = arith.mulf %276, %277 : vector<64x16xf32>
    %c64 = arith.constant 64 : index
    %c0_28 = arith.constant 0 : index
    %279 = vector.load %arg2[%c64, %c0_28] : memref<344x128xf32, #tpu.memory_space<vmem>>, vector<16x24xf32>
    %c80 = arith.constant 80 : index
    %c0_29 = arith.constant 0 : index
    %280 = vector.load %arg2[%c80, %c0_29] : memref<344x128xf32, #tpu.memory_space<vmem>>, vector<1x24xf32>
    %cst_30 = arith.constant dense<0.000000e+00> : vector<64x24xf32>
    %281 = tpu.matmul %278, %279, %cst_30 {dimension_numbers = #tpu.dot_dimension_numbers<[1], [0], [0], [1], [0, 0, 1, 1], [], []>} : vector<64x16xf32>, vector<16x24xf32>, vector<64x24xf32> -> vector<64x24xf32>
    %282 = vector.broadcast %280 : vector<1x24xf32> to vector<64x24xf32>
    %283 = arith.addf %281, %282 : vector<64x24xf32>
    %cst_31 = arith.constant 3.000000e+00 : f32
    %284 = vector.broadcast %cst_31 : f32 to vector<64x24xf32>
    %285 = arith.addf %283, %284 : vector<64x24xf32>
    %cst_32 = arith.constant 0.000000e+00 : f32
    %cst_33 = arith.constant 6.000000e+00 : f32
    %286 = vector.broadcast %cst_32 : f32 to vector<64x24xf32>
    %287 = arith.maximumf %286, %285 : vector<64x24xf32>
    %288 = vector.broadcast %cst_33 : f32 to vector<64x24xf32>
    %289 = arith.minimumf %288, %287 : vector<64x24xf32>
    %290 = arith.mulf %283, %289 : vector<64x24xf32>
    %cst_34 = arith.constant 0.166666672 : f32
    %291 = vector.broadcast %cst_34 : f32 to vector<64x24xf32>
    %292 = arith.mulf %290, %291 : vector<64x24xf32>
    %c1_i32_35 = arith.constant 1 : i32
    %293 = tpu.dynamic_rotate %292 by %c1_i32_35 dim 0 : vector<64x24xf32>, i32 -> vector<64x24xf32>
    %c63_i32 = arith.constant 63 : i32
    %294 = tpu.dynamic_rotate %292 by %c63_i32 dim 0 : vector<64x24xf32>, i32 -> vector<64x24xf32>
    %c88 = arith.constant 88 : index
    %c0_36 = arith.constant 0 : index
    %295 = vector.load %arg2[%c88, %c0_36] : memref<344x128xf32, #tpu.memory_space<vmem>>, vector<9x24xf32>
    %c104 = arith.constant 104 : index
    %c0_37 = arith.constant 0 : index
    %296 = vector.load %arg2[%c104, %c0_37] : memref<344x128xf32, #tpu.memory_space<vmem>>, vector<1x24xf32>
    %297 = tpu.iota {dimensions = array<i32: 0>} : vector<8x24xi32>
    %c1_i32_38 = arith.constant 1 : i32
    %298 = vector.broadcast %c1_i32_38 : i32 to vector<8x24xi32>
    %299 = arith.cmpi sge, %297, %298 : vector<8x24xi32>
    %c6_i32_39 = arith.constant 6 : i32
    %300 = vector.broadcast %c6_i32_39 : i32 to vector<8x24xi32>
    %301 = arith.cmpi sle, %297, %300 : vector<8x24xi32>
    %302 = vector.extract_strided_slice %295 {offsets = [0, 0], sizes = [1, 24], strides = [1, 1]} : vector<9x24xf32> to vector<1x24xf32>
    %303 = vector.shape_cast %302 : vector<1x24xf32> to vector<1x24xf32>
    %304 = vector.broadcast %303 : vector<1x24xf32> to vector<8x24xf32>
    %cst_40 = arith.constant 0.000000e+00 : f32
    %305 = vector.broadcast %cst_40 : f32 to vector<8x24xf32>
    %306 = arith.select %299, %304, %305 : vector<8x24xi1>, vector<8x24xf32>
    %307 = vector.extract_strided_slice %295 {offsets = [1, 0], sizes = [1, 24], strides = [1, 1]} : vector<9x24xf32> to vector<1x24xf32>
    %308 = vector.shape_cast %307 : vector<1x24xf32> to vector<1x24xf32>
    %309 = vector.broadcast %308 : vector<1x24xf32> to vector<8x24xf32>
    %310 = vector.extract_strided_slice %295 {offsets = [2, 0], sizes = [1, 24], strides = [1, 1]} : vector<9x24xf32> to vector<1x24xf32>
    %311 = vector.shape_cast %310 : vector<1x24xf32> to vector<1x24xf32>
    %312 = vector.broadcast %311 : vector<1x24xf32> to vector<8x24xf32>
    %cst_41 = arith.constant 0.000000e+00 : f32
    %313 = vector.broadcast %cst_41 : f32 to vector<8x24xf32>
    %314 = arith.select %301, %312, %313 : vector<8x24xi1>, vector<8x24xf32>
    %315 = vector.extract_strided_slice %295 {offsets = [3, 0], sizes = [1, 24], strides = [1, 1]} : vector<9x24xf32> to vector<1x24xf32>
    %316 = vector.shape_cast %315 : vector<1x24xf32> to vector<1x24xf32>
    %317 = vector.broadcast %316 : vector<1x24xf32> to vector<8x24xf32>
    %cst_42 = arith.constant 0.000000e+00 : f32
    %318 = vector.broadcast %cst_42 : f32 to vector<8x24xf32>
    %319 = arith.select %299, %317, %318 : vector<8x24xi1>, vector<8x24xf32>
    %320 = vector.extract_strided_slice %295 {offsets = [4, 0], sizes = [1, 24], strides = [1, 1]} : vector<9x24xf32> to vector<1x24xf32>
    %321 = vector.shape_cast %320 : vector<1x24xf32> to vector<1x24xf32>
    %322 = vector.broadcast %321 : vector<1x24xf32> to vector<8x24xf32>
    %323 = vector.extract_strided_slice %295 {offsets = [5, 0], sizes = [1, 24], strides = [1, 1]} : vector<9x24xf32> to vector<1x24xf32>
    %324 = vector.shape_cast %323 : vector<1x24xf32> to vector<1x24xf32>
    %325 = vector.broadcast %324 : vector<1x24xf32> to vector<8x24xf32>
    %cst_43 = arith.constant 0.000000e+00 : f32
    %326 = vector.broadcast %cst_43 : f32 to vector<8x24xf32>
    %327 = arith.select %301, %325, %326 : vector<8x24xi1>, vector<8x24xf32>
    %328 = vector.extract_strided_slice %295 {offsets = [6, 0], sizes = [1, 24], strides = [1, 1]} : vector<9x24xf32> to vector<1x24xf32>
    %329 = vector.shape_cast %328 : vector<1x24xf32> to vector<1x24xf32>
    %330 = vector.broadcast %329 : vector<1x24xf32> to vector<8x24xf32>
    %cst_44 = arith.constant 0.000000e+00 : f32
    %331 = vector.broadcast %cst_44 : f32 to vector<8x24xf32>
    %332 = arith.select %299, %330, %331 : vector<8x24xi1>, vector<8x24xf32>
    %333 = vector.extract_strided_slice %295 {offsets = [7, 0], sizes = [1, 24], strides = [1, 1]} : vector<9x24xf32> to vector<1x24xf32>
    %334 = vector.shape_cast %333 : vector<1x24xf32> to vector<1x24xf32>
    %335 = vector.broadcast %334 : vector<1x24xf32> to vector<8x24xf32>
    %336 = vector.extract_strided_slice %295 {offsets = [8, 0], sizes = [1, 24], strides = [1, 1]} : vector<9x24xf32> to vector<1x24xf32>
    %337 = vector.shape_cast %336 : vector<1x24xf32> to vector<1x24xf32>
    %338 = vector.broadcast %337 : vector<1x24xf32> to vector<8x24xf32>
    %cst_45 = arith.constant 0.000000e+00 : f32
    %339 = vector.broadcast %cst_45 : f32 to vector<8x24xf32>
    %340 = arith.select %301, %338, %339 : vector<8x24xi1>, vector<8x24xf32>
    %341 = vector.extract_strided_slice %293 {offsets = [0, 0], sizes = [8, 24], strides = [1, 1]} : vector<64x24xf32> to vector<8x24xf32>
    %342 = arith.mulf %341, %319 : vector<8x24xf32>
    %343 = vector.extract_strided_slice %292 {offsets = [0, 0], sizes = [8, 24], strides = [1, 1]} : vector<64x24xf32> to vector<8x24xf32>
    %344 = arith.mulf %343, %322 : vector<8x24xf32>
    %345 = arith.addf %342, %344 : vector<8x24xf32>
    %346 = vector.extract_strided_slice %294 {offsets = [0, 0], sizes = [8, 24], strides = [1, 1]} : vector<64x24xf32> to vector<8x24xf32>
    %347 = arith.mulf %346, %327 : vector<8x24xf32>
    %348 = arith.addf %345, %347 : vector<8x24xf32>
    %349 = vector.extract_strided_slice %293 {offsets = [8, 0], sizes = [8, 24], strides = [1, 1]} : vector<64x24xf32> to vector<8x24xf32>
    %350 = arith.mulf %349, %332 : vector<8x24xf32>
    %351 = arith.addf %348, %350 : vector<8x24xf32>
    %352 = vector.extract_strided_slice %292 {offsets = [8, 0], sizes = [8, 24], strides = [1, 1]} : vector<64x24xf32> to vector<8x24xf32>
    %353 = arith.mulf %352, %335 : vector<8x24xf32>
    %354 = arith.addf %351, %353 : vector<8x24xf32>
    %355 = vector.extract_strided_slice %294 {offsets = [8, 0], sizes = [8, 24], strides = [1, 1]} : vector<64x24xf32> to vector<8x24xf32>
    %356 = arith.mulf %355, %340 : vector<8x24xf32>
    %357 = arith.addf %354, %356 : vector<8x24xf32>
    %358 = vector.extract_strided_slice %293 {offsets = [8, 0], sizes = [8, 24], strides = [1, 1]} : vector<64x24xf32> to vector<8x24xf32>
    %359 = arith.mulf %358, %306 : vector<8x24xf32>
    %360 = vector.extract_strided_slice %292 {offsets = [8, 0], sizes = [8, 24], strides = [1, 1]} : vector<64x24xf32> to vector<8x24xf32>
    %361 = arith.mulf %360, %309 : vector<8x24xf32>
    %362 = arith.addf %359, %361 : vector<8x24xf32>
    %363 = vector.extract_strided_slice %294 {offsets = [8, 0], sizes = [8, 24], strides = [1, 1]} : vector<64x24xf32> to vector<8x24xf32>
    %364 = arith.mulf %363, %314 : vector<8x24xf32>
    %365 = arith.addf %362, %364 : vector<8x24xf32>
    %366 = vector.extract_strided_slice %293 {offsets = [16, 0], sizes = [8, 24], strides = [1, 1]} : vector<64x24xf32> to vector<8x24xf32>
    %367 = arith.mulf %366, %319 : vector<8x24xf32>
    %368 = arith.addf %365, %367 : vector<8x24xf32>
    %369 = vector.extract_strided_slice %292 {offsets = [16, 0], sizes = [8, 24], strides = [1, 1]} : vector<64x24xf32> to vector<8x24xf32>
    %370 = arith.mulf %369, %322 : vector<8x24xf32>
    %371 = arith.addf %368, %370 : vector<8x24xf32>
    %372 = vector.extract_strided_slice %294 {offsets = [16, 0], sizes = [8, 24], strides = [1, 1]} : vector<64x24xf32> to vector<8x24xf32>
    %373 = arith.mulf %372, %327 : vector<8x24xf32>
    %374 = arith.addf %371, %373 : vector<8x24xf32>
    %375 = vector.extract_strided_slice %293 {offsets = [24, 0], sizes = [8, 24], strides = [1, 1]} : vector<64x24xf32> to vector<8x24xf32>
    %376 = arith.mulf %375, %332 : vector<8x24xf32>
    %377 = arith.addf %374, %376 : vector<8x24xf32>
    %378 = vector.extract_strided_slice %292 {offsets = [24, 0], sizes = [8, 24], strides = [1, 1]} : vector<64x24xf32> to vector<8x24xf32>
    %379 = arith.mulf %378, %335 : vector<8x24xf32>
    %380 = arith.addf %377, %379 : vector<8x24xf32>
    %381 = vector.extract_strided_slice %294 {offsets = [24, 0], sizes = [8, 24], strides = [1, 1]} : vector<64x24xf32> to vector<8x24xf32>
    %382 = arith.mulf %381, %340 : vector<8x24xf32>
    %383 = arith.addf %380, %382 : vector<8x24xf32>
    %384 = vector.extract_strided_slice %293 {offsets = [32, 0], sizes = [8, 24], strides = [1, 1]} : vector<64x24xf32> to vector<8x24xf32>
    %385 = arith.mulf %384, %319 : vector<8x24xf32>
    %386 = vector.extract_strided_slice %292 {offsets = [32, 0], sizes = [8, 24], strides = [1, 1]} : vector<64x24xf32> to vector<8x24xf32>
    %387 = arith.mulf %386, %322 : vector<8x24xf32>
    %388 = arith.addf %385, %387 : vector<8x24xf32>
    %389 = vector.extract_strided_slice %294 {offsets = [32, 0], sizes = [8, 24], strides = [1, 1]} : vector<64x24xf32> to vector<8x24xf32>
    %390 = arith.mulf %389, %327 : vector<8x24xf32>
    %391 = arith.addf %388, %390 : vector<8x24xf32>
    %392 = vector.extract_strided_slice %293 {offsets = [40, 0], sizes = [8, 24], strides = [1, 1]} : vector<64x24xf32> to vector<8x24xf32>
    %393 = arith.mulf %392, %332 : vector<8x24xf32>
    %394 = arith.addf %391, %393 : vector<8x24xf32>
    %395 = vector.extract_strided_slice %292 {offsets = [40, 0], sizes = [8, 24], strides = [1, 1]} : vector<64x24xf32> to vector<8x24xf32>
    %396 = arith.mulf %395, %335 : vector<8x24xf32>
    %397 = arith.addf %394, %396 : vector<8x24xf32>
    %398 = vector.extract_strided_slice %294 {offsets = [40, 0], sizes = [8, 24], strides = [1, 1]} : vector<64x24xf32> to vector<8x24xf32>
    %399 = arith.mulf %398, %340 : vector<8x24xf32>
    %400 = arith.addf %397, %399 : vector<8x24xf32>
    %401 = vector.extract_strided_slice %293 {offsets = [40, 0], sizes = [8, 24], strides = [1, 1]} : vector<64x24xf32> to vector<8x24xf32>
    %402 = arith.mulf %401, %306 : vector<8x24xf32>
    %403 = vector.extract_strided_slice %292 {offsets = [40, 0], sizes = [8, 24], strides = [1, 1]} : vector<64x24xf32> to vector<8x24xf32>
    %404 = arith.mulf %403, %309 : vector<8x24xf32>
    %405 = arith.addf %402, %404 : vector<8x24xf32>
    %406 = vector.extract_strided_slice %294 {offsets = [40, 0], sizes = [8, 24], strides = [1, 1]} : vector<64x24xf32> to vector<8x24xf32>
    %407 = arith.mulf %406, %314 : vector<8x24xf32>
    %408 = arith.addf %405, %407 : vector<8x24xf32>
    %409 = vector.extract_strided_slice %293 {offsets = [48, 0], sizes = [8, 24], strides = [1, 1]} : vector<64x24xf32> to vector<8x24xf32>
    %410 = arith.mulf %409, %319 : vector<8x24xf32>
    %411 = arith.addf %408, %410 : vector<8x24xf32>
    %412 = vector.extract_strided_slice %292 {offsets = [48, 0], sizes = [8, 24], strides = [1, 1]} : vector<64x24xf32> to vector<8x24xf32>
    %413 = arith.mulf %412, %322 : vector<8x24xf32>
    %414 = arith.addf %411, %413 : vector<8x24xf32>
    %415 = vector.extract_strided_slice %294 {offsets = [48, 0], sizes = [8, 24], strides = [1, 1]} : vector<64x24xf32> to vector<8x24xf32>
    %416 = arith.mulf %415, %327 : vector<8x24xf32>
    %417 = arith.addf %414, %416 : vector<8x24xf32>
    %418 = vector.extract_strided_slice %293 {offsets = [56, 0], sizes = [8, 24], strides = [1, 1]} : vector<64x24xf32> to vector<8x24xf32>
    %419 = arith.mulf %418, %332 : vector<8x24xf32>
    %420 = arith.addf %417, %419 : vector<8x24xf32>
    %421 = vector.extract_strided_slice %292 {offsets = [56, 0], sizes = [8, 24], strides = [1, 1]} : vector<64x24xf32> to vector<8x24xf32>
    %422 = arith.mulf %421, %335 : vector<8x24xf32>
    %423 = arith.addf %420, %422 : vector<8x24xf32>
    %424 = vector.extract_strided_slice %294 {offsets = [56, 0], sizes = [8, 24], strides = [1, 1]} : vector<64x24xf32> to vector<8x24xf32>
    %425 = arith.mulf %424, %340 : vector<8x24xf32>
    %426 = arith.addf %423, %425 : vector<8x24xf32>
    %427 = tpu.concatenate %357, %383, %400, %426 in 0 : vector<8x24xf32>, vector<8x24xf32>, vector<8x24xf32>, vector<8x24xf32> -> vector<32x24xf32>
    %428 = vector.broadcast %296 : vector<1x24xf32> to vector<32x24xf32>
    %429 = arith.addf %427, %428 : vector<32x24xf32>
    %cst_46 = arith.constant 3.000000e+00 : f32
    %430 = vector.broadcast %cst_46 : f32 to vector<32x24xf32>
    %431 = arith.addf %429, %430 : vector<32x24xf32>
    %cst_47 = arith.constant 0.000000e+00 : f32
    %cst_48 = arith.constant 6.000000e+00 : f32
    %432 = vector.broadcast %cst_47 : f32 to vector<32x24xf32>
    %433 = arith.maximumf %432, %431 : vector<32x24xf32>
    %434 = vector.broadcast %cst_48 : f32 to vector<32x24xf32>
    %435 = arith.minimumf %434, %433 : vector<32x24xf32>
    %436 = arith.mulf %429, %435 : vector<32x24xf32>
    %cst_49 = arith.constant 0.166666672 : f32
    %437 = vector.broadcast %cst_49 : f32 to vector<32x24xf32>
    %438 = arith.mulf %436, %437 : vector<32x24xf32>
    %c112 = arith.constant 112 : index
    %c0_50 = arith.constant 0 : index
    %439 = vector.load %arg2[%c112, %c0_50] : memref<344x128xf32, #tpu.memory_space<vmem>>, vector<24x36xf32>
    %c136 = arith.constant 136 : index
    %c0_51 = arith.constant 0 : index
    %440 = vector.load %arg2[%c136, %c0_51] : memref<344x128xf32, #tpu.memory_space<vmem>>, vector<1x36xf32>
    %cst_52 = arith.constant dense<0.000000e+00> : vector<32x36xf32>
    %441 = tpu.matmul %438, %439, %cst_52 {dimension_numbers = #tpu.dot_dimension_numbers<[1], [0], [0], [1], [0, 0, 1, 1], [], []>} : vector<32x24xf32>, vector<24x36xf32>, vector<32x36xf32> -> vector<32x36xf32>
    %442 = vector.broadcast %440 : vector<1x36xf32> to vector<32x36xf32>
    %443 = arith.addf %441, %442 : vector<32x36xf32>
    %cst_53 = arith.constant 3.000000e+00 : f32
    %444 = vector.broadcast %cst_53 : f32 to vector<32x36xf32>
    %445 = arith.addf %443, %444 : vector<32x36xf32>
    %cst_54 = arith.constant 0.000000e+00 : f32
    %cst_55 = arith.constant 6.000000e+00 : f32
    %446 = vector.broadcast %cst_54 : f32 to vector<32x36xf32>
    %447 = arith.maximumf %446, %445 : vector<32x36xf32>
    %448 = vector.broadcast %cst_55 : f32 to vector<32x36xf32>
    %449 = arith.minimumf %448, %447 : vector<32x36xf32>
    %450 = arith.mulf %443, %449 : vector<32x36xf32>
    %cst_56 = arith.constant 0.166666672 : f32
    %451 = vector.broadcast %cst_56 : f32 to vector<32x36xf32>
    %452 = arith.mulf %450, %451 : vector<32x36xf32>
    %c1_i32_57 = arith.constant 1 : i32
    %453 = tpu.dynamic_rotate %452 by %c1_i32_57 dim 0 : vector<32x36xf32>, i32 -> vector<32x36xf32>
    %c31_i32 = arith.constant 31 : i32
    %454 = tpu.dynamic_rotate %452 by %c31_i32 dim 0 : vector<32x36xf32>, i32 -> vector<32x36xf32>
    %c144 = arith.constant 144 : index
    %c0_58 = arith.constant 0 : index
    %455 = vector.load %arg2[%c144, %c0_58] : memref<344x128xf32, #tpu.memory_space<vmem>>, vector<9x36xf32>
    %c160 = arith.constant 160 : index
    %c0_59 = arith.constant 0 : index
    %456 = vector.load %arg2[%c160, %c0_59] : memref<344x128xf32, #tpu.memory_space<vmem>>, vector<1x36xf32>
    %457 = tpu.iota {dimensions = array<i32: 0>} : vector<8x36xi32>
    %c1_i32_60 = arith.constant 1 : i32
    %458 = vector.broadcast %c1_i32_60 : i32 to vector<8x36xi32>
    %459 = arith.cmpi sge, %457, %458 : vector<8x36xi32>
    %c6_i32_61 = arith.constant 6 : i32
    %460 = vector.broadcast %c6_i32_61 : i32 to vector<8x36xi32>
    %461 = arith.cmpi sle, %457, %460 : vector<8x36xi32>
    %462 = vector.extract_strided_slice %455 {offsets = [3, 0], sizes = [1, 36], strides = [1, 1]} : vector<9x36xf32> to vector<1x36xf32>
    %463 = vector.shape_cast %462 : vector<1x36xf32> to vector<1x36xf32>
    %464 = vector.broadcast %463 : vector<1x36xf32> to vector<8x36xf32>
    %cst_62 = arith.constant 0.000000e+00 : f32
    %465 = vector.broadcast %cst_62 : f32 to vector<8x36xf32>
    %466 = arith.select %459, %464, %465 : vector<8x36xi1>, vector<8x36xf32>
    %467 = vector.extract_strided_slice %455 {offsets = [4, 0], sizes = [1, 36], strides = [1, 1]} : vector<9x36xf32> to vector<1x36xf32>
    %468 = vector.shape_cast %467 : vector<1x36xf32> to vector<1x36xf32>
    %469 = vector.broadcast %468 : vector<1x36xf32> to vector<8x36xf32>
    %470 = vector.extract_strided_slice %455 {offsets = [5, 0], sizes = [1, 36], strides = [1, 1]} : vector<9x36xf32> to vector<1x36xf32>
    %471 = vector.shape_cast %470 : vector<1x36xf32> to vector<1x36xf32>
    %472 = vector.broadcast %471 : vector<1x36xf32> to vector<8x36xf32>
    %cst_63 = arith.constant 0.000000e+00 : f32
    %473 = vector.broadcast %cst_63 : f32 to vector<8x36xf32>
    %474 = arith.select %461, %472, %473 : vector<8x36xi1>, vector<8x36xf32>
    %475 = vector.extract_strided_slice %455 {offsets = [6, 0], sizes = [1, 36], strides = [1, 1]} : vector<9x36xf32> to vector<1x36xf32>
    %476 = vector.shape_cast %475 : vector<1x36xf32> to vector<1x36xf32>
    %477 = vector.broadcast %476 : vector<1x36xf32> to vector<8x36xf32>
    %cst_64 = arith.constant 0.000000e+00 : f32
    %478 = vector.broadcast %cst_64 : f32 to vector<8x36xf32>
    %479 = arith.select %459, %477, %478 : vector<8x36xi1>, vector<8x36xf32>
    %480 = vector.extract_strided_slice %455 {offsets = [7, 0], sizes = [1, 36], strides = [1, 1]} : vector<9x36xf32> to vector<1x36xf32>
    %481 = vector.shape_cast %480 : vector<1x36xf32> to vector<1x36xf32>
    %482 = vector.broadcast %481 : vector<1x36xf32> to vector<8x36xf32>
    %483 = vector.extract_strided_slice %455 {offsets = [8, 0], sizes = [1, 36], strides = [1, 1]} : vector<9x36xf32> to vector<1x36xf32>
    %484 = vector.shape_cast %483 : vector<1x36xf32> to vector<1x36xf32>
    %485 = vector.broadcast %484 : vector<1x36xf32> to vector<8x36xf32>
    %cst_65 = arith.constant 0.000000e+00 : f32
    %486 = vector.broadcast %cst_65 : f32 to vector<8x36xf32>
    %487 = arith.select %461, %485, %486 : vector<8x36xi1>, vector<8x36xf32>
    %488 = vector.extract_strided_slice %453 {offsets = [0, 0], sizes = [8, 36], strides = [1, 1]} : vector<32x36xf32> to vector<8x36xf32>
    %489 = arith.mulf %488, %466 : vector<8x36xf32>
    %490 = vector.extract_strided_slice %452 {offsets = [0, 0], sizes = [8, 36], strides = [1, 1]} : vector<32x36xf32> to vector<8x36xf32>
    %491 = arith.mulf %490, %469 : vector<8x36xf32>
    %492 = arith.addf %489, %491 : vector<8x36xf32>
    %493 = vector.extract_strided_slice %454 {offsets = [0, 0], sizes = [8, 36], strides = [1, 1]} : vector<32x36xf32> to vector<8x36xf32>
    %494 = arith.mulf %493, %474 : vector<8x36xf32>
    %495 = arith.addf %492, %494 : vector<8x36xf32>
    %496 = vector.extract_strided_slice %453 {offsets = [8, 0], sizes = [8, 36], strides = [1, 1]} : vector<32x36xf32> to vector<8x36xf32>
    %497 = arith.mulf %496, %479 : vector<8x36xf32>
    %498 = arith.addf %495, %497 : vector<8x36xf32>
    %499 = vector.extract_strided_slice %452 {offsets = [8, 0], sizes = [8, 36], strides = [1, 1]} : vector<32x36xf32> to vector<8x36xf32>
    %500 = arith.mulf %499, %482 : vector<8x36xf32>
    %501 = arith.addf %498, %500 : vector<8x36xf32>
    %502 = vector.extract_strided_slice %454 {offsets = [8, 0], sizes = [8, 36], strides = [1, 1]} : vector<32x36xf32> to vector<8x36xf32>
    %503 = arith.mulf %502, %487 : vector<8x36xf32>
    %504 = arith.addf %501, %503 : vector<8x36xf32>
    %505 = vector.extract_strided_slice %453 {offsets = [16, 0], sizes = [8, 36], strides = [1, 1]} : vector<32x36xf32> to vector<8x36xf32>
    %506 = arith.mulf %505, %466 : vector<8x36xf32>
    %507 = vector.extract_strided_slice %452 {offsets = [16, 0], sizes = [8, 36], strides = [1, 1]} : vector<32x36xf32> to vector<8x36xf32>
    %508 = arith.mulf %507, %469 : vector<8x36xf32>
    %509 = arith.addf %506, %508 : vector<8x36xf32>
    %510 = vector.extract_strided_slice %454 {offsets = [16, 0], sizes = [8, 36], strides = [1, 1]} : vector<32x36xf32> to vector<8x36xf32>
    %511 = arith.mulf %510, %474 : vector<8x36xf32>
    %512 = arith.addf %509, %511 : vector<8x36xf32>
    %513 = vector.extract_strided_slice %453 {offsets = [24, 0], sizes = [8, 36], strides = [1, 1]} : vector<32x36xf32> to vector<8x36xf32>
    %514 = arith.mulf %513, %479 : vector<8x36xf32>
    %515 = arith.addf %512, %514 : vector<8x36xf32>
    %516 = vector.extract_strided_slice %452 {offsets = [24, 0], sizes = [8, 36], strides = [1, 1]} : vector<32x36xf32> to vector<8x36xf32>
    %517 = arith.mulf %516, %482 : vector<8x36xf32>
    %518 = arith.addf %515, %517 : vector<8x36xf32>
    %519 = vector.extract_strided_slice %454 {offsets = [24, 0], sizes = [8, 36], strides = [1, 1]} : vector<32x36xf32> to vector<8x36xf32>
    %520 = arith.mulf %519, %487 : vector<8x36xf32>
    %521 = arith.addf %518, %520 : vector<8x36xf32>
    %522 = tpu.concatenate %504, %521 in 0 : vector<8x36xf32>, vector<8x36xf32> -> vector<16x36xf32>
    %523 = vector.broadcast %456 : vector<1x36xf32> to vector<16x36xf32>
    %524 = arith.addf %522, %523 : vector<16x36xf32>
    %cst_66 = arith.constant 3.000000e+00 : f32
    %525 = vector.broadcast %cst_66 : f32 to vector<16x36xf32>
    %526 = arith.addf %524, %525 : vector<16x36xf32>
    %cst_67 = arith.constant 0.000000e+00 : f32
    %cst_68 = arith.constant 6.000000e+00 : f32
    %527 = vector.broadcast %cst_67 : f32 to vector<16x36xf32>
    %528 = arith.maximumf %527, %526 : vector<16x36xf32>
    %529 = vector.broadcast %cst_68 : f32 to vector<16x36xf32>
    %530 = arith.minimumf %529, %528 : vector<16x36xf32>
    %531 = arith.mulf %524, %530 : vector<16x36xf32>
    %cst_69 = arith.constant 0.166666672 : f32
    %532 = vector.broadcast %cst_69 : f32 to vector<16x36xf32>
    %533 = arith.mulf %531, %532 : vector<16x36xf32>
    %c168 = arith.constant 168 : index
    %c0_70 = arith.constant 0 : index
    %534 = vector.load %arg2[%c168, %c0_70] : memref<344x128xf32, #tpu.memory_space<vmem>>, vector<36x12xf32>
    %c208 = arith.constant 208 : index
    %c0_71 = arith.constant 0 : index
    %535 = vector.load %arg2[%c208, %c0_71] : memref<344x128xf32, #tpu.memory_space<vmem>>, vector<1x12xf32>
    %cst_72 = arith.constant dense<0.000000e+00> : vector<16x12xf32>
    %536 = tpu.matmul %533, %534, %cst_72 {dimension_numbers = #tpu.dot_dimension_numbers<[1], [0], [0], [1], [0, 0, 1, 1], [], []>} : vector<16x36xf32>, vector<36x12xf32>, vector<16x12xf32> -> vector<16x12xf32>
    %537 = vector.broadcast %535 : vector<1x12xf32> to vector<16x12xf32>
    %538 = arith.addf %536, %537 : vector<16x12xf32>
    %c216 = arith.constant 216 : index
    %c0_73 = arith.constant 0 : index
    %539 = vector.load %arg2[%c216, %c0_73] : memref<344x128xf32, #tpu.memory_space<vmem>>, vector<12x48xf32>
    %c232 = arith.constant 232 : index
    %c0_74 = arith.constant 0 : index
    %540 = vector.load %arg2[%c232, %c0_74] : memref<344x128xf32, #tpu.memory_space<vmem>>, vector<1x48xf32>
    %cst_75 = arith.constant dense<0.000000e+00> : vector<16x48xf32>
    %541 = tpu.matmul %538, %539, %cst_75 {dimension_numbers = #tpu.dot_dimension_numbers<[1], [0], [0], [1], [0, 0, 1, 1], [], []>} : vector<16x12xf32>, vector<12x48xf32>, vector<16x48xf32> -> vector<16x48xf32>
    %542 = vector.broadcast %540 : vector<1x48xf32> to vector<16x48xf32>
    %543 = arith.addf %541, %542 : vector<16x48xf32>
    %cst_76 = arith.constant 3.000000e+00 : f32
    %544 = vector.broadcast %cst_76 : f32 to vector<16x48xf32>
    %545 = arith.addf %543, %544 : vector<16x48xf32>
    %cst_77 = arith.constant 0.000000e+00 : f32
    %cst_78 = arith.constant 6.000000e+00 : f32
    %546 = vector.broadcast %cst_77 : f32 to vector<16x48xf32>
    %547 = arith.maximumf %546, %545 : vector<16x48xf32>
    %548 = vector.broadcast %cst_78 : f32 to vector<16x48xf32>
    %549 = arith.minimumf %548, %547 : vector<16x48xf32>
    %550 = arith.mulf %543, %549 : vector<16x48xf32>
    %cst_79 = arith.constant 0.166666672 : f32
    %551 = vector.broadcast %cst_79 : f32 to vector<16x48xf32>
    %552 = arith.mulf %550, %551 : vector<16x48xf32>
    %c1_i32_80 = arith.constant 1 : i32
    %553 = tpu.dynamic_rotate %552 by %c1_i32_80 dim 0 : vector<16x48xf32>, i32 -> vector<16x48xf32>
    %c15_i32 = arith.constant 15 : i32
    %554 = tpu.dynamic_rotate %552 by %c15_i32 dim 0 : vector<16x48xf32>, i32 -> vector<16x48xf32>
    %c240 = arith.constant 240 : index
    %c0_81 = arith.constant 0 : index
    %555 = vector.load %arg2[%c240, %c0_81] : memref<344x128xf32, #tpu.memory_space<vmem>>, vector<9x48xf32>
    %c256 = arith.constant 256 : index
    %c0_82 = arith.constant 0 : index
    %556 = vector.load %arg2[%c256, %c0_82] : memref<344x128xf32, #tpu.memory_space<vmem>>, vector<1x48xf32>
    %557 = tpu.iota {dimensions = array<i32: 0>} : vector<8x48xi32>
    %c1_i32_83 = arith.constant 1 : i32
    %558 = vector.broadcast %c1_i32_83 : i32 to vector<8x48xi32>
    %559 = arith.cmpi sge, %557, %558 : vector<8x48xi32>
    %c6_i32_84 = arith.constant 6 : i32
    %560 = vector.broadcast %c6_i32_84 : i32 to vector<8x48xi32>
    %561 = arith.cmpi sle, %557, %560 : vector<8x48xi32>
    %562 = vector.extract_strided_slice %555 {offsets = [3, 0], sizes = [1, 48], strides = [1, 1]} : vector<9x48xf32> to vector<1x48xf32>
    %563 = vector.shape_cast %562 : vector<1x48xf32> to vector<1x48xf32>
    %564 = vector.broadcast %563 : vector<1x48xf32> to vector<8x48xf32>
    %cst_85 = arith.constant 0.000000e+00 : f32
    %565 = vector.broadcast %cst_85 : f32 to vector<8x48xf32>
    %566 = arith.select %559, %564, %565 : vector<8x48xi1>, vector<8x48xf32>
    %567 = vector.extract_strided_slice %555 {offsets = [4, 0], sizes = [1, 48], strides = [1, 1]} : vector<9x48xf32> to vector<1x48xf32>
    %568 = vector.shape_cast %567 : vector<1x48xf32> to vector<1x48xf32>
    %569 = vector.broadcast %568 : vector<1x48xf32> to vector<8x48xf32>
    %570 = vector.extract_strided_slice %555 {offsets = [5, 0], sizes = [1, 48], strides = [1, 1]} : vector<9x48xf32> to vector<1x48xf32>
    %571 = vector.shape_cast %570 : vector<1x48xf32> to vector<1x48xf32>
    %572 = vector.broadcast %571 : vector<1x48xf32> to vector<8x48xf32>
    %cst_86 = arith.constant 0.000000e+00 : f32
    %573 = vector.broadcast %cst_86 : f32 to vector<8x48xf32>
    %574 = arith.select %561, %572, %573 : vector<8x48xi1>, vector<8x48xf32>
    %575 = vector.extract_strided_slice %553 {offsets = [0, 0], sizes = [8, 48], strides = [1, 1]} : vector<16x48xf32> to vector<8x48xf32>
    %576 = arith.mulf %575, %566 : vector<8x48xf32>
    %577 = vector.extract_strided_slice %552 {offsets = [0, 0], sizes = [8, 48], strides = [1, 1]} : vector<16x48xf32> to vector<8x48xf32>
    %578 = arith.mulf %577, %569 : vector<8x48xf32>
    %579 = arith.addf %576, %578 : vector<8x48xf32>
    %580 = vector.extract_strided_slice %554 {offsets = [0, 0], sizes = [8, 48], strides = [1, 1]} : vector<16x48xf32> to vector<8x48xf32>
    %581 = arith.mulf %580, %574 : vector<8x48xf32>
    %582 = arith.addf %579, %581 : vector<8x48xf32>
    %583 = vector.extract_strided_slice %553 {offsets = [8, 0], sizes = [8, 48], strides = [1, 1]} : vector<16x48xf32> to vector<8x48xf32>
    %584 = arith.mulf %583, %566 : vector<8x48xf32>
    %585 = vector.extract_strided_slice %552 {offsets = [8, 0], sizes = [8, 48], strides = [1, 1]} : vector<16x48xf32> to vector<8x48xf32>
    %586 = arith.mulf %585, %569 : vector<8x48xf32>
    %587 = arith.addf %584, %586 : vector<8x48xf32>
    %588 = vector.extract_strided_slice %554 {offsets = [8, 0], sizes = [8, 48], strides = [1, 1]} : vector<16x48xf32> to vector<8x48xf32>
    %589 = arith.mulf %588, %574 : vector<8x48xf32>
    %590 = arith.addf %587, %589 : vector<8x48xf32>
    %591 = tpu.concatenate %582, %590 in 0 : vector<8x48xf32>, vector<8x48xf32> -> vector<16x48xf32>
    %592 = vector.broadcast %556 : vector<1x48xf32> to vector<16x48xf32>
    %593 = arith.addf %591, %592 : vector<16x48xf32>
    %cst_87 = arith.constant 3.000000e+00 : f32
    %594 = vector.broadcast %cst_87 : f32 to vector<16x48xf32>
    %595 = arith.addf %593, %594 : vector<16x48xf32>
    %cst_88 = arith.constant 0.000000e+00 : f32
    %cst_89 = arith.constant 6.000000e+00 : f32
    %596 = vector.broadcast %cst_88 : f32 to vector<16x48xf32>
    %597 = arith.maximumf %596, %595 : vector<16x48xf32>
    %598 = vector.broadcast %cst_89 : f32 to vector<16x48xf32>
    %599 = arith.minimumf %598, %597 : vector<16x48xf32>
    %600 = arith.mulf %593, %599 : vector<16x48xf32>
    %cst_90 = arith.constant 0.166666672 : f32
    %601 = vector.broadcast %cst_90 : f32 to vector<16x48xf32>
    %602 = arith.mulf %600, %601 : vector<16x48xf32>
    %c264 = arith.constant 264 : index
    %c0_91 = arith.constant 0 : index
    %603 = vector.load %arg2[%c264, %c0_91] : memref<344x128xf32, #tpu.memory_space<vmem>>, vector<48x12xf32>
    %c312 = arith.constant 312 : index
    %c0_92 = arith.constant 0 : index
    %604 = vector.load %arg2[%c312, %c0_92] : memref<344x128xf32, #tpu.memory_space<vmem>>, vector<1x12xf32>
    %cst_93 = arith.constant dense<0.000000e+00> : vector<16x12xf32>
    %605 = tpu.matmul %602, %603, %cst_93 {dimension_numbers = #tpu.dot_dimension_numbers<[1], [0], [0], [1], [0, 0, 1, 1], [], []>} : vector<16x48xf32>, vector<48x12xf32>, vector<16x12xf32> -> vector<16x12xf32>
    %606 = vector.broadcast %604 : vector<1x12xf32> to vector<16x12xf32>
    %607 = arith.addf %605, %606 : vector<16x12xf32>
    %608 = arith.addf %607, %538 : vector<16x12xf32>
    %c320 = arith.constant 320 : index
    %c0_94 = arith.constant 0 : index
    %609 = vector.load %arg2[%c320, %c0_94] : memref<344x128xf32, #tpu.memory_space<vmem>>, vector<12x128xf32>
    %c336 = arith.constant 336 : index
    %c0_95 = arith.constant 0 : index
    %610 = vector.load %arg2[%c336, %c0_95] : memref<344x128xf32, #tpu.memory_space<vmem>>, vector<1x128xf32>
    %cst_96 = arith.constant dense<0.000000e+00> : vector<16x128xf32>
    %611 = tpu.matmul %608, %609, %cst_96 {dimension_numbers = #tpu.dot_dimension_numbers<[1], [0], [0], [1], [0, 0, 1, 1], [], []>} : vector<16x12xf32>, vector<12x128xf32>, vector<16x128xf32> -> vector<16x128xf32>
    %612 = vector.broadcast %610 : vector<1x128xf32> to vector<16x128xf32>
    %613 = arith.addf %611, %612 : vector<16x128xf32>
    %cst_97 = arith.constant 3.000000e+00 : f32
    %614 = vector.broadcast %cst_97 : f32 to vector<16x128xf32>
    %615 = arith.addf %613, %614 : vector<16x128xf32>
    %cst_98 = arith.constant 0.000000e+00 : f32
    %cst_99 = arith.constant 6.000000e+00 : f32
    %616 = vector.broadcast %cst_98 : f32 to vector<16x128xf32>
    %617 = arith.maximumf %616, %615 : vector<16x128xf32>
    %618 = vector.broadcast %cst_99 : f32 to vector<16x128xf32>
    %619 = arith.minimumf %618, %617 : vector<16x128xf32>
    %620 = arith.mulf %613, %619 : vector<16x128xf32>
    %cst_100 = arith.constant 0.166666672 : f32
    %621 = vector.broadcast %cst_100 : f32 to vector<16x128xf32>
    %622 = arith.mulf %620, %621 : vector<16x128xf32>
    %c0_101 = arith.constant 0 : index
    %c0_102 = arith.constant 0 : index
    %623 = vector.load %arg3[%c0_101, %c0_102] : memref<16x128xf32, #tpu.memory_space<vmem>>, vector<16x128xf32>
    tpu.vector_store %arg3[%c0_101, %c0_102], %622 {strides = array<i32>} : memref<16x128xf32, #tpu.memory_space<vmem>>, vector<16x128xf32>,
    return
  }
  func.func @transform_0(%arg0: i32) -> (i32, i32) {
    %c0_i32 = arith.constant 0 : i32
    %c0_i32_0 = arith.constant 0 : i32
    %c0_i32_1 = arith.constant 0 : i32
    return %c0_i32, %c0_i32_0 : i32, i32
  }
  func.func @transform_1(%arg0: i32) -> (i32, i32) {
    %c0_i32 = arith.constant 0 : i32
    %c0_i32_0 = arith.constant 0 : i32
    %c0_i32_1 = arith.constant 0 : i32
    return %c0_i32, %c0_i32_0 : i32, i32
  }
  func.func @transform_2(%arg0: i32) -> (i32, i32) {
    %c0_i32 = arith.constant 0 : i32
    %c0_i32_0 = arith.constant 0 : i32
    %c0_i32_1 = arith.constant 0 : i32
    return %c0_i32, %c0_i32_0 : i32, i32
  }
}

</mosaic_0001>

<llo_original>
// kernel: mn_forward.1
$region0: #{mn_forward.1}
  #allocation0 [shape = 'u32[]', space=smem, size = 0x4, offset = 0x4, fixed_abs, tag = 'smem constant byte address 0x4 - core index']
  #allocation1 [shape = 'u32[144,128]{1,0:T(1,128)}', space=vmem, size = 0x12000, scoped, tag = 'internal scratch']
  %s0 = inlined_call_operand.vmem [shape: f32[128,16], index: 0, kind: input, shape index: {}]
  %s1 = inlined_call_operand.vmem [shape: f32[344,128], index: 1, kind: input, shape index: {}]
  %s2 = inlined_call_operand.hbm [shape: f32[16,128], index: 2, kind: output, shape index: {}]
  %s3 = sld [smem:[#allocation0]]
  $region18: #{mn_forward.1} parent=0
    _
  %s5 = ssub.s32 1, %s3
  %s6 = scalar_select 0, %s5, %s3
  $region1: #{mn_forward.1} parent=0
    #allocation2 [shape = 'u8[8192]{0}', space=vmem, size = 0x2000, scoped, tag = 'output window, operand 0, single buffered']
    #allocation3 [shape = 's32[1]{0}', space=sflag, size = 0x4, scoped, tag = 'scoped memory for mn_forward.1']
    %7 = vsyncpa [#allocation3], 0
    // Predicated region
    $region2: #{mn_forward.1} parent=1 // pred_check
      _
    $region3: #{mn_forward.1} parent=1 // pred_check_branch
      %9 = sbr.rel (0) target = $region5
    $region4: #{mn_forward.1} parent=1 // pred_region
      _
    $region5: #{mn_forward.1} parent=1 // pred_fallthru
      _
    // Predicated region
    $region6: #{mn_forward.1} parent=1 // pred_check
      _
    $region7: #{mn_forward.1} parent=1 // pred_check_branch
      %11 = sbr.rel (0) target = $region9
    $region8: #{mn_forward.1} parent=1 // pred_region
      _
    $region9: #{mn_forward.1} parent=1 // pred_fallthru
      _
    %v12 = vld [vmem:[%s0] sm:$0xff]
    %v13 = vld [vmem:[%s0 + $0x8] sm:$0xff]
    %v14 = vld [vmem:[%s0 + $0x10] sm:$0xff]
    %v15 = vld [vmem:[%s0 + $0x18] sm:$0xff]
    %v16 = vld [vmem:[%s0 + $0x20] sm:$0xff]
    %v17 = vld [vmem:[%s0 + $0x28] sm:$0xff]
    %v18 = vld [vmem:[%s0 + $0x30] sm:$0xff]
    %v19 = vld [vmem:[%s0 + $0x38] sm:$0xff]
    %v20 = vld [vmem:[%s0 + $0x40] sm:$0xff]
    %v21 = vld [vmem:[%s0 + $0x48] sm:$0xff]
    %v22 = vld [vmem:[%s0 + $0x50] sm:$0xff]
    %v23 = vld [vmem:[%s0 + $0x58] sm:$0xff]
    %v24 = vld [vmem:[%s0 + $0x60] sm:$0xff]
    %v25 = vld [vmem:[%s0 + $0x68] sm:$0xff]
    %v26 = vld [vmem:[%s0 + $0x70] sm:$0xff]
    %v27 = vld [vmem:[%s0 + $0x78] sm:$0xff]
    %v28 = vld [vmem:[%s1] sm:$0xff]
    %v29 = vld [vmem:[%s1 + $0x8] sm:$0xff]
    %v30 = vld [vmem:[%s1 + $0x10] sm:$0x1]
    %v31 = vlaneseq
    %v32 = vshrl.u32 %v31, 7
    %v33 = vsub.s32 0, %v32
    %v34 = vrot.slane %v30, %v33
    %vm35 = vcmask 130048
    %v37 = vsel %vm35, %v12, 0
    %v40 = vsel %vm35, %v13, 0
    %v43 = vsel %vm35, %v14, 0
    %v46 = vsel %vm35, %v15, 0
    %v49 = vsel %vm35, %v16, 0
    %v52 = vsel %vm35, %v17, 0
    %v55 = vsel %vm35, %v18, 0
    %v58 = vsel %vm35, %v19, 0
    %v61 = vsel %vm35, %v20, 0
    %v64 = vsel %vm35, %v21, 0
    %v67 = vsel %vm35, %v22, 0
    %v70 = vsel %vm35, %v23, 0
    %v73 = vsel %vm35, %v24, 0
    %v76 = vsel %vm35, %v25, 0
    %v79 = vsel %vm35, %v26, 0
    %v82 = vsel %vm35, %v27, 0
    %84 = vmatprep.subr.mxu0 0.0
    %85 = vmatpush1.msra.mxu0 %v28
    %86 = vmatprep.subr.mxu0 0.0
    %87 = vmatpush1.msra.mxu0 %v29
    %88 = vmatprep.subr.mxu0 0.0
    %89 = vmatpush1.msra.mxu0 0.0
    %90 = vmatprep.subr.mxu0 0.0
    %91 = vmatpush1.msra.mxu0 0.0
    %92 = vmatprep.subr.mxu0 0.0
    %93 = vmatpush1.msra.mxu0 0.0
    %94 = vmatprep.subr.mxu0 0.0
    %95 = vmatpush1.msra.mxu0 0.0
    %96 = vmatprep.subr.mxu0 0.0
    %97 = vmatpush1.msra.mxu0 0.0
    %98 = vmatprep.subr.mxu0 0.0
    %99 = vmatpush1.msra.mxu0 0.0
    %100 = vmatprep.subr.mxu0 0.0
    %101 = vmatpush1.msra.mxu0 0.0
    %102 = vmatprep.subr.mxu0 0.0
    %103 = vmatpush1.msra.mxu0 0.0
    %104 = vmatprep.subr.mxu0 0.0
    %105 = vmatpush1.msra.mxu0 0.0
    %106 = vmatprep.subr.mxu0 0.0
    %107 = vmatpush1.msra.mxu0 0.0
    %108 = vmatprep.subr.mxu0 0.0
    %109 = vmatpush1.msra.mxu0 0.0
    %110 = vmatprep.subr.mxu0 0.0
    %111 = vmatpush1.msra.mxu0 0.0
    %112 = vmatprep.subr.mxu0 0.0
    %113 = vmatpush1.msra.mxu0 0.0
    %114 = vmatprep.subr.mxu0 0.0
    %115 = vmatpush1.msra.mxu0 0.0
    %116 = vmatprep.subr.mxu0 0.0
    %117 = vmatpush1.msra.mxu0 0.0
    %118 = vmatprep.subr.mxu0 0.0
    %119 = vmatpush1.msra.mxu0 0.0
    %120 = vmatprep.subr.mxu0 0.0
    %121 = vmatpush1.msra.mxu0 0.0
    %122 = vmatprep.subr.mxu0 0.0
    %123 = vmatpush1.msra.mxu0 0.0
    %124 = vmatprep.subr.mxu0 0.0
    %125 = vmatpush1.msra.mxu0 0.0
    %126 = vmatprep.subr.mxu0 0.0
    %127 = vmatpush1.msra.mxu0 0.0
    %128 = vmatprep.subr.mxu0 0.0
    %129 = vmatpush1.msra.mxu0 0.0
    %130 = vmatprep.subr.mxu0 0.0
    %131 = vmatpush1.msra.mxu0 0.0
    %132 = vmatprep.subr.mxu0 0.0
    %133 = vmatpush1.msra.mxu0 0.0
    %134 = vmatprep.subr.mxu0 0.0
    %135 = vmatpush1.msra.mxu0 0.0
    %136 = vmatprep.subr.mxu0 0.0
    %137 = vmatpush1.msra.mxu0 0.0
    %138 = vmatprep.subr.mxu0 0.0
    %139 = vmatpush1.msra.mxu0 0.0
    %140 = vmatprep.subr.mxu0 0.0
    %141 = vmatpush1.msra.mxu0 0.0
    %142 = vmatprep.subr.mxu0 0.0
    %143 = vmatpush1.msra.mxu0 0.0
    %144 = vmatprep.subr.mxu0 0.0
    %145 = vmatpush1.msra.mxu0 0.0
    %146 = vmatprep.subr.mxu0 0.0
    %147 = vmatpush1.msra.mxu0 0.0
    %148 = vmatprep.mubr.f32.mxu0 0.0
    %149 = vmatmul.mubr.f32.gmra.mrb[0].mxu0 %v37
    %v150 = vpop.f32.mrb[0].mxu0
    %v151 = vadd.f32 %v34, %v150
    %v152 = vpop.f32.mrb[0].mxu0
    %153 = vmatprep.mubr.f32.mxu0 0.0
    %154 = vmatmul.mubr.f32.gmra.mrb[0].mxu0 %v40
    %v155 = vpop.f32.mrb[0].mxu0
    %v156 = vadd.f32 %v34, %v155
    %v157 = vpop.f32.mrb[0].mxu0
    %158 = vmatprep.mubr.f32.mxu0 0.0
    %159 = vmatmul.mubr.f32.gmra.mrb[0].mxu0 %v43
    %v160 = vpop.f32.mrb[0].mxu0
    %v161 = vadd.f32 %v34, %v160
    %v162 = vpop.f32.mrb[0].mxu0
    %163 = vmatprep.mubr.f32.mxu0 0.0
    %164 = vmatmul.mubr.f32.gmra.mrb[0].mxu0 %v46
    %v165 = vpop.f32.mrb[0].mxu0
    %v166 = vadd.f32 %v34, %v165
    %v167 = vpop.f32.mrb[0].mxu0
    %168 = vmatprep.mubr.f32.mxu0 0.0
    %169 = vmatmul.mubr.f32.gmra.mrb[0].mxu0 %v49
    %v170 = vpop.f32.mrb[0].mxu0
    %v171 = vadd.f32 %v34, %v170
    %v172 = vpop.f32.mrb[0].mxu0
    %173 = vmatprep.mubr.f32.mxu0 0.0
    %174 = vmatmul.mubr.f32.gmra.mrb[0].mxu0 %v52
    %v175 = vpop.f32.mrb[0].mxu0
    %v176 = vadd.f32 %v34, %v175
    %v177 = vpop.f32.mrb[0].mxu0
    %178 = vmatprep.mubr.f32.mxu0 0.0
    %179 = vmatmul.mubr.f32.gmra.mrb[0].mxu0 %v55
    %v180 = vpop.f32.mrb[0].mxu0
    %v181 = vadd.f32 %v34, %v180
    %v182 = vpop.f32.mrb[0].mxu0
    %183 = vmatprep.mubr.f32.mxu0 0.0
    %184 = vmatmul.mubr.f32.gmra.mrb[0].mxu0 %v58
    %v185 = vpop.f32.mrb[0].mxu0
    %v186 = vadd.f32 %v34, %v185
    %v187 = vpop.f32.mrb[0].mxu0
    %188 = vmatprep.mubr.f32.mxu0 0.0
    %189 = vmatmul.mubr.f32.gmra.mrb[0].mxu0 %v61
    %v190 = vpop.f32.mrb[0].mxu0
    %v191 = vadd.f32 %v34, %v190
    %v192 = vpop.f32.mrb[0].mxu0
    %193 = vmatprep.mubr.f32.mxu0 0.0
    %194 = vmatmul.mubr.f32.gmra.mrb[0].mxu0 %v64
    %v195 = vpop.f32.mrb[0].mxu0
    %v196 = vadd.f32 %v34, %v195
    %v197 = vpop.f32.mrb[0].mxu0
    %198 = vmatprep.mubr.f32.mxu0 0.0
    %199 = vmatmul.mubr.f32.gmra.mrb[0].mxu0 %v67
    %v200 = vpop.f32.mrb[0].mxu0
    %v201 = vadd.f32 %v34, %v200
    %v202 = vpop.f32.mrb[0].mxu0
    %203 = vmatprep.mubr.f32.mxu0 0.0
    %204 = vmatmul.mubr.f32.gmra.mrb[0].mxu0 %v70
    %v205 = vpop.f32.mrb[0].mxu0
    %v206 = vadd.f32 %v34, %v205
    %v207 = vpop.f32.mrb[0].mxu0
    %208 = vmatprep.mubr.f32.mxu0 0.0
    %209 = vmatmul.mubr.f32.gmra.mrb[0].mxu0 %v73
    %v210 = vpop.f32.mrb[0].mxu0
    %v211 = vadd.f32 %v34, %v210
    %v212 = vpop.f32.mrb[0].mxu0
    %213 = vmatprep.mubr.f32.mxu0 0.0
    %214 = vmatmul.mubr.f32.gmra.mrb[0].mxu0 %v76
    %v215 = vpop.f32.mrb[0].mxu0
    %v216 = vadd.f32 %v34, %v215
    %v217 = vpop.f32.mrb[0].mxu0
    %218 = vmatprep.mubr.f32.mxu0 0.0
    %219 = vmatmul.mubr.f32.gmra.mrb[0].mxu0 %v79
    %v220 = vpop.f32.mrb[0].mxu0
    %v221 = vadd.f32 %v34, %v220
    %v222 = vpop.f32.mrb[0].mxu0
    %223 = vmatprep.mubr.f32.mxu0 0.0
    %224 = vmatmul.mubr.f32.gmra.mrb[0].mxu0 %v82
    %v225 = vpop.f32.mrb[0].mxu0
    %v226 = vadd.f32 %v34, %v225
    %v227 = vpop.f32.mrb[0].mxu0
    %228 = vdwg.mxu0
    %v229 = vadd.f32 %v151, 3.0
    %v230 = vadd.f32 %v156, 3.0
    %v231 = vadd.f32 %v161, 3.0
    %v232 = vadd.f32 %v166, 3.0
    %v233 = vadd.f32 %v171, 3.0
    %v234 = vadd.f32 %v176, 3.0
    %v235 = vadd.f32 %v181, 3.0
    %v236 = vadd.f32 %v186, 3.0
    %v237 = vadd.f32 %v191, 3.0
    %v238 = vadd.f32 %v196, 3.0
    %v239 = vadd.f32 %v201, 3.0
    %v240 = vadd.f32 %v206, 3.0
    %v241 = vadd.f32 %v211, 3.0
    %v242 = vadd.f32 %v216, 3.0
    %v243 = vadd.f32 %v221, 3.0
    %v244 = vadd.f32 %v226, 3.0
    %v245 = vmax.f32 %v229, 0.0
    %v246 = vmax.f32 %v230, 0.0
    %v247 = vmax.f32 %v231, 0.0
    %v248 = vmax.f32 %v232, 0.0
    %v249 = vmax.f32 %v233, 0.0
    %v250 = vmax.f32 %v234, 0.0
    %v251 = vmax.f32 %v235, 0.0
    %v252 = vmax.f32 %v236, 0.0
    %v253 = vmax.f32 %v237, 0.0
    %v254 = vmax.f32 %v238, 0.0
    %v255 = vmax.f32 %v239, 0.0
    %v256 = vmax.f32 %v240, 0.0
    %v257 = vmax.f32 %v241, 0.0
    %v258 = vmax.f32 %v242, 0.0
    %v259 = vmax.f32 %v243, 0.0
    %v260 = vmax.f32 %v244, 0.0
    %v261 = vmin.f32 %v245, 6.0
    %v262 = vmin.f32 %v246, 6.0
    %v263 = vmin.f32 %v247, 6.0
    %v264 = vmin.f32 %v248, 6.0
    %v265 = vmin.f32 %v249, 6.0
    %v266 = vmin.f32 %v250, 6.0
    %v267 = vmin.f32 %v251, 6.0
    %v268 = vmin.f32 %v252, 6.0
    %v269 = vmin.f32 %v253, 6.0
    %v270 = vmin.f32 %v254, 6.0
    %v271 = vmin.f32 %v255, 6.0
    %v272 = vmin.f32 %v256, 6.0
    %v273 = vmin.f32 %v257, 6.0
    %v274 = vmin.f32 %v258, 6.0
    %v275 = vmin.f32 %v259, 6.0
    %v276 = vmin.f32 %v260, 6.0
    %v277 = vmul.f32 %v151, %v261
    %v278 = vmul.f32 %v156, %v262
    %v279 = vmul.f32 %v161, %v263
    %v280 = vmul.f32 %v166, %v264
    %v281 = vmul.f32 %v171, %v265
    %v282 = vmul.f32 %v176, %v266
    %v283 = vmul.f32 %v181, %v267
    %v284 = vmul.f32 %v186, %v268
    %v285 = vmul.f32 %v191, %v269
    %v286 = vmul.f32 %v196, %v270
    %v287 = vmul.f32 %v201, %v271
    %v288 = vmul.f32 %v206, %v272
    %v289 = vmul.f32 %v211, %v273
    %v290 = vmul.f32 %v216, %v274
    %v291 = vmul.f32 %v221, %v275
    %v292 = vmul.f32 %v226, %v276
    %v293 = vmul.f32 %v277, 0.16666667
    %v294 = vmul.f32 %v278, 0.16666667
    %v295 = vmul.f32 %v279, 0.16666667
    %v296 = vmul.f32 %v280, 0.16666667
    %v297 = vmul.f32 %v281, 0.16666667
    %v298 = vmul.f32 %v282, 0.16666667
    %v299 = vmul.f32 %v283, 0.16666667
    %v300 = vmul.f32 %v284, 0.16666667
    %v301 = vmul.f32 %v285, 0.16666667
    %v302 = vmul.f32 %v286, 0.16666667
    %v303 = vmul.f32 %v287, 0.16666667
    %v304 = vmul.f32 %v288, 0.16666667
    %v305 = vmul.f32 %v289, 0.16666667
    %v306 = vmul.f32 %v290, 0.16666667
    %v307 = vmul.f32 %v291, 0.16666667
    %v308 = vmul.f32 %v292, 0.16666667
    %v309 = vld [vmem:[%s1 + $0x18] sm:$0xff]
    %v310 = vld [vmem:[%s1 + $0x20] sm:$0x1]
    %v311 = vlaneseq
    %v312 = vshrl.u32 %v311, 7
    %v313 = vsub.s32 0, %v312
    %v314 = vrot.slane %v310, %v313
    %vm315 = vcmask 64512
    %v317 = vsel %vm315, %v293, 0
    %v320 = vsel %vm315, %v294, 0
    %v323 = vsel %vm315, %v295, 0
    %v326 = vsel %vm315, %v296, 0
    %v329 = vsel %vm315, %v297, 0
    %v332 = vsel %vm315, %v298, 0
    %v335 = vsel %vm315, %v299, 0
    %v338 = vsel %vm315, %v300, 0
    %v341 = vsel %vm315, %v301, 0
    %v344 = vsel %vm315, %v302, 0
    %v347 = vsel %vm315, %v303, 0
    %v350 = vsel %vm315, %v304, 0
    %v353 = vsel %vm315, %v305, 0
    %v356 = vsel %vm315, %v306, 0
    %v359 = vsel %vm315, %v307, 0
    %v362 = vsel %vm315, %v308, 0
    %364 = vmatprep.subr.mxu0 0.0
    %365 = vmatpush1.msra.mxu0 %v309
    %366 = vmatprep.subr.mxu0 0.0
    %367 = vmatpush1.msra.mxu0 0.0
    %368 = vmatprep.subr.mxu0 0.0
    %369 = vmatpush1.msra.mxu0 0.0
    %370 = vmatprep.subr.mxu0 0.0
    %371 = vmatpush1.msra.mxu0 0.0
    %372 = vmatprep.subr.mxu0 0.0
    %373 = vmatpush1.msra.mxu0 0.0
    %374 = vmatprep.subr.mxu0 0.0
    %375 = vmatpush1.msra.mxu0 0.0
    %376 = vmatprep.subr.mxu0 0.0
    %377 = vmatpush1.msra.mxu0 0.0
    %378 = vmatprep.subr.mxu0 0.0
    %379 = vmatpush1.msra.mxu0 0.0
    %380 = vmatprep.subr.mxu0 0.0
    %381 = vmatpush1.msra.mxu0 0.0
    %382 = vmatprep.subr.mxu0 0.0
    %383 = vmatpush1.msra.mxu0 0.0
    %384 = vmatprep.subr.mxu0 0.0
    %385 = vmatpush1.msra.mxu0 0.0
    %386 = vmatprep.subr.mxu0 0.0
    %387 = vmatpush1.msra.mxu0 0.0
    %388 = vmatprep.subr.mxu0 0.0
    %389 = vmatpush1.msra.mxu0 0.0
    %390 = vmatprep.subr.mxu0 0.0
    %391 = vmatpush1.msra.mxu0 0.0
    %392 = vmatprep.subr.mxu0 0.0
    %393 = vmatpush1.msra.mxu0 0.0
    %394 = vmatprep.subr.mxu0 0.0
    %395 = vmatpush1.msra.mxu0 0.0
    %396 = vmatprep.subr.mxu0 0.0
    %397 = vmatpush1.msra.mxu0 0.0
    %398 = vmatprep.subr.mxu0 0.0
    %399 = vmatpush1.msra.mxu0 0.0
    %400 = vmatprep.subr.mxu0 0.0
    %401 = vmatpush1.msra.mxu0 0.0
    %402 = vmatprep.subr.mxu0 0.0
    %403 = vmatpush1.msra.mxu0 0.0
    %404 = vmatprep.subr.mxu0 0.0
    %405 = vmatpush1.msra.mxu0 0.0
    %406 = vmatprep.subr.mxu0 0.0
    %407 = vmatpush1.msra.mxu0 0.0
    %408 = vmatprep.subr.mxu0 0.0
    %409 = vmatpush1.msra.mxu0 0.0
    %410 = vmatprep.subr.mxu0 0.0
    %411 = vmatpush1.msra.mxu0 0.0
    %412 = vmatprep.subr.mxu0 0.0
    %413 = vmatpush1.msra.mxu0 0.0
    %414 = vmatprep.subr.mxu0 0.0
    %415 = vmatpush1.msra.mxu0 0.0
    %416 = vmatprep.subr.mxu0 0.0
    %417 = vmatpush1.msra.mxu0 0.0
    %418 = vmatprep.subr.mxu0 0.0
    %419 = vmatpush1.msra.mxu0 0.0
    %420 = vmatprep.subr.mxu0 0.0
    %421 = vmatpush1.msra.mxu0 0.0
    %422 = vmatprep.subr.mxu0 0.0
    %423 = vmatpush1.msra.mxu0 0.0
    %424 = vmatprep.subr.mxu0 0.0
    %425 = vmatpush1.msra.mxu0 0.0
    %426 = vmatprep.subr.mxu0 0.0
    %427 = vmatpush1.msra.mxu0 0.0
    %428 = vmatprep.mubr.f32.mxu0 0.0
    %429 = vmatmul.mubr.f32.gmra.mrb[0].mxu0 %v317
    %v430 = vpop.f32.mrb[0].mxu0
    %v431 = vadd.f32 %v314, %v430
    %v432 = vpop.f32.mrb[0].mxu0
    %433 = vmatprep.mubr.f32.mxu0 0.0
    %434 = vmatmul.mubr.f32.gmra.mrb[0].mxu0 %v320
    %v435 = vpop.f32.mrb[0].mxu0
    %v436 = vadd.f32 %v314, %v435
    %v437 = vpop.f32.mrb[0].mxu0
    %438 = vmatprep.mubr.f32.mxu0 0.0
    %439 = vmatmul.mubr.f32.gmra.mrb[0].mxu0 %v323
    %v440 = vpop.f32.mrb[0].mxu0
    %v441 = vadd.f32 %v314, %v440
    %v442 = vpop.f32.mrb[0].mxu0
    %443 = vmatprep.mubr.f32.mxu0 0.0
    %444 = vmatmul.mubr.f32.gmra.mrb[0].mxu0 %v326
    %v445 = vpop.f32.mrb[0].mxu0
    %v446 = vadd.f32 %v314, %v445
    %v447 = vpop.f32.mrb[0].mxu0
    %448 = vmatprep.mubr.f32.mxu0 0.0
    %449 = vmatmul.mubr.f32.gmra.mrb[0].mxu0 %v329
    %v450 = vpop.f32.mrb[0].mxu0
    %v451 = vadd.f32 %v314, %v450
    %v452 = vpop.f32.mrb[0].mxu0
    %453 = vmatprep.mubr.f32.mxu0 0.0
    %454 = vmatmul.mubr.f32.gmra.mrb[0].mxu0 %v332
    %v455 = vpop.f32.mrb[0].mxu0
    %v456 = vadd.f32 %v314, %v455
    %v457 = vpop.f32.mrb[0].mxu0
    %458 = vmatprep.mubr.f32.mxu0 0.0
    %459 = vmatmul.mubr.f32.gmra.mrb[0].mxu0 %v335
    %v460 = vpop.f32.mrb[0].mxu0
    %v461 = vadd.f32 %v314, %v460
    %v462 = vpop.f32.mrb[0].mxu0
    %463 = vmatprep.mubr.f32.mxu0 0.0
    %464 = vmatmul.mubr.f32.gmra.mrb[0].mxu0 %v338
    %v465 = vpop.f32.mrb[0].mxu0
    %v466 = vadd.f32 %v314, %v465
    %v467 = vpop.f32.mrb[0].mxu0
    %468 = vmatprep.mubr.f32.mxu0 0.0
    %469 = vmatmul.mubr.f32.gmra.mrb[0].mxu0 %v341
    %v470 = vpop.f32.mrb[0].mxu0
    %v471 = vadd.f32 %v314, %v470
    %v472 = vpop.f32.mrb[0].mxu0
    %473 = vmatprep.mubr.f32.mxu0 0.0
    %474 = vmatmul.mubr.f32.gmra.mrb[0].mxu0 %v344
    %v475 = vpop.f32.mrb[0].mxu0
    %v476 = vadd.f32 %v314, %v475
    %v477 = vpop.f32.mrb[0].mxu0
    %478 = vmatprep.mubr.f32.mxu0 0.0
    %479 = vmatmul.mubr.f32.gmra.mrb[0].mxu0 %v347
    %v480 = vpop.f32.mrb[0].mxu0
    %v481 = vadd.f32 %v314, %v480
    %v482 = vpop.f32.mrb[0].mxu0
    %483 = vmatprep.mubr.f32.mxu0 0.0
    %484 = vmatmul.mubr.f32.gmra.mrb[0].mxu0 %v350
    %v485 = vpop.f32.mrb[0].mxu0
    %v486 = vadd.f32 %v314, %v485
    %v487 = vpop.f32.mrb[0].mxu0
    %488 = vmatprep.mubr.f32.mxu0 0.0
    %489 = vmatmul.mubr.f32.gmra.mrb[0].mxu0 %v353
    %v490 = vpop.f32.mrb[0].mxu0
    %v491 = vadd.f32 %v314, %v490
    %v492 = vpop.f32.mrb[0].mxu0
    %493 = vmatprep.mubr.f32.mxu0 0.0
    %494 = vmatmul.mubr.f32.gmra.mrb[0].mxu0 %v356
    %v495 = vpop.f32.mrb[0].mxu0
    %v496 = vadd.f32 %v314, %v495
    %v497 = vpop.f32.mrb[0].mxu0
    %498 = vmatprep.mubr.f32.mxu0 0.0
    %499 = vmatmul.mubr.f32.gmra.mrb[0].mxu0 %v359
    %v500 = vpop.f32.mrb[0].mxu0
    %v501 = vadd.f32 %v314, %v500
    %v502 = vpop.f32.mrb[0].mxu0
    %503 = vmatprep.mubr.f32.mxu0 0.0
    %504 = vmatmul.mubr.f32.gmra.mrb[0].mxu0 %v362
    %v505 = vpop.f32.mrb[0].mxu0
    %v506 = vadd.f32 %v314, %v505
    %v507 = vpop.f32.mrb[0].mxu0
    %508 = vdwg.mxu0
    %v509 = vadd.f32 %v431, 3.0
    %v510 = vadd.f32 %v436, 3.0
    %v511 = vadd.f32 %v441, 3.0
    %v512 = vadd.f32 %v446, 3.0
    %v513 = vadd.f32 %v451, 3.0
    %v514 = vadd.f32 %v456, 3.0
    %v515 = vadd.f32 %v461, 3.0
    %v516 = vadd.f32 %v466, 3.0
    %v517 = vadd.f32 %v471, 3.0
    %v518 = vadd.f32 %v476, 3.0
    %v519 = vadd.f32 %v481, 3.0
    %v520 = vadd.f32 %v486, 3.0
    %v521 = vadd.f32 %v491, 3.0
    %v522 = vadd.f32 %v496, 3.0
    %v523 = vadd.f32 %v501, 3.0
    %v524 = vadd.f32 %v506, 3.0
    %v525 = vmax.f32 %v509, 0.0
    %v526 = vmax.f32 %v510, 0.0
    %v527 = vmax.f32 %v511, 0.0
    %v528 = vmax.f32 %v512, 0.0
    %v529 = vmax.f32 %v513, 0.0
    %v530 = vmax.f32 %v514, 0.0
    %v531 = vmax.f32 %v515, 0.0
    %v532 = vmax.f32 %v516, 0.0
    %v533 = vmax.f32 %v517, 0.0
    %v534 = vmax.f32 %v518, 0.0
    %v535 = vmax.f32 %v519, 0.0
    %v536 = vmax.f32 %v520, 0.0
    %v537 = vmax.f32 %v521, 0.0
    %v538 = vmax.f32 %v522, 0.0
    %v539 = vmax.f32 %v523, 0.0
    %v540 = vmax.f32 %v524, 0.0
    %v541 = vmin.f32 %v525, 6.0
    %v542 = vmin.f32 %v526, 6.0
    %v543 = vmin.f32 %v527, 6.0
    %v544 = vmin.f32 %v528, 6.0
    %v545 = vmin.f32 %v529, 6.0
    %v546 = vmin.f32 %v530, 6.0
    %v547 = vmin.f32 %v531, 6.0
    %v548 = vmin.f32 %v532, 6.0
    %v549 = vmin.f32 %v533, 6.0
    %v550 = vmin.f32 %v534, 6.0
    %v551 = vmin.f32 %v535, 6.0
    %v552 = vmin.f32 %v536, 6.0
    %v553 = vmin.f32 %v537, 6.0
    %v554 = vmin.f32 %v538, 6.0
    %v555 = vmin.f32 %v539, 6.0
    %v556 = vmin.f32 %v540, 6.0
    %v557 = vmul.f32 %v431, %v541
    %v558 = vmul.f32 %v436, %v542
    %v559 = vmul.f32 %v441, %v543
    %v560 = vmul.f32 %v446, %v544
    %v561 = vmul.f32 %v451, %v545
    %v562 = vmul.f32 %v456, %v546
    %v563 = vmul.f32 %v461, %v547
    %v564 = vmul.f32 %v466, %v548
    %v565 = vmul.f32 %v471, %v549
    %v566 = vmul.f32 %v476, %v550
    %v567 = vmul.f32 %v481, %v551
    %v568 = vmul.f32 %v486, %v552
    %v569 = vmul.f32 %v491, %v553
    %v570 = vmul.f32 %v496, %v554
    %v571 = vmul.f32 %v501, %v555
    %v572 = vmul.f32 %v506, %v556
    %v573 = vmul.f32 %v557, 0.16666667
    %v574 = vmul.f32 %v558, 0.16666667
    %v575 = vmul.f32 %v559, 0.16666667
    %v576 = vmul.f32 %v560, 0.16666667
    %v577 = vmul.f32 %v561, 0.16666667
    %v578 = vmul.f32 %v562, 0.16666667
    %v579 = vmul.f32 %v563, 0.16666667
    %v580 = vmul.f32 %v564, 0.16666667
    %v581 = vmul.f32 %v565, 0.16666667
    %v582 = vmul.f32 %v566, 0.16666667
    %v583 = vmul.f32 %v567, 0.16666667
    %v584 = vmul.f32 %v568, 0.16666667
    %v585 = vmul.f32 %v569, 0.16666667
    %v586 = vmul.f32 %v570, 0.16666667
    %v587 = vmul.f32 %v571, 0.16666667
    %v588 = vmul.f32 %v572, 0.16666667
    %v589 = vrot.slane %v573, 7
    %v590 = vrot.slane %v574, 7
    %v591 = vrot.slane %v575, 7
    %v592 = vrot.slane %v576, 7
    %v593 = vrot.slane %v577, 7
    %v594 = vrot.slane %v578, 7
    %v595 = vrot.slane %v579, 7
    %v596 = vrot.slane %v580, 7
    %v597 = vrot.slane %v581, 7
    %v598 = vrot.slane %v582, 7
    %v599 = vrot.slane %v583, 7
    %v600 = vrot.slane %v584, 7
    %v601 = vrot.slane %v585, 7
    %v602 = vrot.slane %v586, 7
    %v603 = vrot.slane %v587, 7
    %v604 = vrot.slane %v588, 7
    %v605 = vlaneseq
    %v606 = vshrl.u32 %v605, 7
    %vm607 = vcmp.lt.s32.totalorder %v606, 1
    %v608 = vsel %vm607, %v603, %v604
    %v609 = vsel %vm607, %v602, %v603
    %v610 = vsel %vm607, %v601, %v602
    %v611 = vsel %vm607, %v600, %v601
    %v612 = vsel %vm607, %v599, %v600
    %v613 = vsel %vm607, %v598, %v599
    %v614 = vsel %vm607, %v597, %v598
    %v615 = vsel %vm607, %v596, %v597
    %v616 = vsel %vm607, %v595, %v596
    %v617 = vsel %vm607, %v594, %v595
    %v618 = vsel %vm607, %v593, %v594
    %v619 = vsel %vm607, %v592, %v593
    %v620 = vsel %vm607, %v591, %v592
    %v621 = vsel %vm607, %v590, %v591
    %v622 = vsel %vm607, %v589, %v590
    %v623 = vsel %vm607, %v604, %v589
    %v624 = vrot.slane %v573, 1
    %v625 = vrot.slane %v574, 1
    %v626 = vrot.slane %v575, 1
    %v627 = vrot.slane %v576, 1
    %v628 = vrot.slane %v577, 1
    %v629 = vrot.slane %v578, 1
    %v630 = vrot.slane %v579, 1
    %v631 = vrot.slane %v580, 1
    %v632 = vrot.slane %v581, 1
    %v633 = vrot.slane %v582, 1
    %v634 = vrot.slane %v583, 1
    %v635 = vrot.slane %v584, 1
    %v636 = vrot.slane %v585, 1
    %v637 = vrot.slane %v586, 1
    %v638 = vrot.slane %v587, 1
    %v639 = vrot.slane %v588, 1
    %vm640 = vcmp.lt.s32.totalorder %v606, 7
    %v641 = vsel %vm640, %v638, %v639
    %v642 = vsel %vm640, %v637, %v638
    %v643 = vsel %vm640, %v636, %v637
    %v644 = vsel %vm640, %v635, %v636
    %v645 = vsel %vm640, %v634, %v635
    %v646 = vsel %vm640, %v633, %v634
    %v647 = vsel %vm640, %v632, %v633
    %v648 = vsel %vm640, %v631, %v632
    %v649 = vsel %vm640, %v630, %v631
    %v650 = vsel %vm640, %v629, %v630
    %v651 = vsel %vm640, %v628, %v629
    %v652 = vsel %vm640, %v627, %v628
    %v653 = vsel %vm640, %v626, %v627
    %v654 = vsel %vm640, %v625, %v626
    %v655 = vsel %vm640, %v624, %v625
    %v656 = vsel %vm640, %v639, %v624
    %v657 = vld [vmem:[%s1 + $0x28] sm:$0xff]
    %v658 = vld [vmem:[%s1 + $0x30] sm:$0x1]
    %v659 = vld [vmem:[%s1 + $0x38] sm:$0x1]
    %vm660 = vcmp.ge.s32.totalorder %v606, 1
    %vm661 = vcmp.le.s32.totalorder %v606, 6
    %v662 = vlaneseq
    %v663 = vshrl.u32 %v662, 7
    %v664 = vsub.s32 0, %v663
    %v665 = vrot.slane %v657, %v664
    %v666 = vsel %vm660, %v665, 0.0
    %v667 = vlaneseq
    %v668 = vshrl.u32 %v667, 7
    %v669 = vsub.s32 1, %v668
    %v670 = vrot.slane %v657, %v669
    %v671 = vlaneseq
    %v672 = vshrl.u32 %v671, 7
    %v673 = vsub.s32 2, %v672
    %v674 = vrot.slane %v657, %v673
    %v675 = vsel %vm661, %v674, 0.0
    %v676 = vlaneseq
    %v677 = vshrl.u32 %v676, 7
    %v678 = vsub.s32 3, %v677
    %v679 = vrot.slane %v657, %v678
    %v680 = vsel %vm660, %v679, 0.0
    %v681 = vlaneseq
    %v682 = vshrl.u32 %v681, 7
    %v683 = vsub.s32 4, %v682
    %v684 = vrot.slane %v657, %v683
    %v685 = vlaneseq
    %v686 = vshrl.u32 %v685, 7
    %v687 = vsub.s32 5, %v686
    %v688 = vrot.slane %v657, %v687
    %v689 = vsel %vm661, %v688, 0.0
    %v690 = vlaneseq
    %v691 = vshrl.u32 %v690, 7
    %v692 = vsub.s32 6, %v691
    %v693 = vrot.slane %v657, %v692
    %v694 = vsel %vm660, %v693, 0.0
    %v695 = vlaneseq
    %v696 = vshrl.u32 %v695, 7
    %v697 = vsub.s32 7, %v696
    %v698 = vrot.slane %v657, %v697
    %v699 = vlaneseq
    %v700 = vshrl.u32 %v699, 7
    %v701 = vsub.s32 0, %v700
    %v702 = vrot.slane %v658, %v701
    %v703 = vsel %vm661, %v702, 0.0
    %v704 = vmul.f32 %v623, %v680
    %v705 = vmul.f32 %v573, %v684
    %v706 = vadd.f32 %v704, %v705
    %v707 = vmul.f32 %v655, %v689
    %v708 = vadd.f32 %v706, %v707
    %v709 = vmul.f32 %v622, %v694
    %v710 = vadd.f32 %v708, %v709
    %v711 = vmul.f32 %v574, %v698
    %v712 = vadd.f32 %v710, %v711
    %v713 = vmul.f32 %v654, %v703
    %v714 = vadd.f32 %v712, %v713
    %v715 = vmul.f32 %v622, %v666
    %v716 = vmul.f32 %v574, %v670
    %v717 = vadd.f32 %v715, %v716
    %v718 = vmul.f32 %v654, %v675
    %v719 = vadd.f32 %v717, %v718
    %v720 = vmul.f32 %v621, %v680
    %v721 = vadd.f32 %v719, %v720
    %v722 = vmul.f32 %v575, %v684
    %v723 = vadd.f32 %v721, %v722
    %v724 = vmul.f32 %v653, %v689
    %v725 = vadd.f32 %v723, %v724
    %v726 = vmul.f32 %v620, %v694
    %v727 = vadd.f32 %v725, %v726
    %v728 = vmul.f32 %v576, %v698
    %v729 = vadd.f32 %v727, %v728
    %v730 = vmul.f32 %v652, %v703
    %v731 = vadd.f32 %v729, %v730
    %v732 = vmul.f32 %v620, %v666
    %v733 = vmul.f32 %v576, %v670
    %v734 = vadd.f32 %v732, %v733
    %v735 = vmul.f32 %v652, %v675
    %v736 = vadd.f32 %v734, %v735
    %v737 = vmul.f32 %v619, %v680
    %v738 = vadd.f32 %v736, %v737
    %v739 = vmul.f32 %v577, %v684
    %v740 = vadd.f32 %v738, %v739
    %v741 = vmul.f32 %v651, %v689
    %v742 = vadd.f32 %v740, %v741
    %v743 = vmul.f32 %v618, %v694
    %v744 = vadd.f32 %v742, %v743
    %v745 = vmul.f32 %v578, %v698
    %v746 = vadd.f32 %v744, %v745
    %v747 = vmul.f32 %v650, %v703
    %v748 = vadd.f32 %v746, %v747
    %v749 = vmul.f32 %v618, %v666
    %v750 = vmul.f32 %v578, %v670
    %v751 = vadd.f32 %v749, %v750
    %v752 = vmul.f32 %v650, %v675
    %v753 = vadd.f32 %v751, %v752
    %v754 = vmul.f32 %v617, %v680
    %v755 = vadd.f32 %v753, %v754
    %v756 = vmul.f32 %v579, %v684
    %v757 = vadd.f32 %v755, %v756
    %v758 = vmul.f32 %v649, %v689
    %v759 = vadd.f32 %v757, %v758
    %v760 = vmul.f32 %v616, %v694
    %v761 = vadd.f32 %v759, %v760
    %v762 = vmul.f32 %v580, %v698
    %v763 = vadd.f32 %v761, %v762
    %v764 = vmul.f32 %v648, %v703
    %v765 = vadd.f32 %v763, %v764
    %v766 = vmul.f32 %v615, %v680
    %v767 = vmul.f32 %v581, %v684
    %v768 = vadd.f32 %v766, %v767
    %v769 = vmul.f32 %v647, %v689
    %v770 = vadd.f32 %v768, %v769
    %v771 = vmul.f32 %v614, %v694
    %v772 = vadd.f32 %v770, %v771
    %v773 = vmul.f32 %v582, %v698
    %v774 = vadd.f32 %v772, %v773
    %v775 = vmul.f32 %v646, %v703
    %v776 = vadd.f32 %v774, %v775
    %v777 = vmul.f32 %v614, %v666
    %v778 = vmul.f32 %v582, %v670
    %v779 = vadd.f32 %v777, %v778
    %v780 = vmul.f32 %v646, %v675
    %v781 = vadd.f32 %v779, %v780
    %v782 = vmul.f32 %v613, %v680
    %v783 = vadd.f32 %v781, %v782
    %v784 = vmul.f32 %v583, %v684
    %v785 = vadd.f32 %v783, %v784
    %v786 = vmul.f32 %v645, %v689
    %v787 = vadd.f32 %v785, %v786
    %v788 = vmul.f32 %v612, %v694
    %v789 = vadd.f32 %v787, %v788
    %v790 = vmul.f32 %v584, %v698
    %v791 = vadd.f32 %v789, %v790
    %v792 = vmul.f32 %v644, %v703
    %v793 = vadd.f32 %v791, %v792
    %v794 = vmul.f32 %v612, %v666
    %v795 = vmul.f32 %v584, %v670
    %v796 = vadd.f32 %v794, %v795
    %v797 = vmul.f32 %v644, %v675
    %v798 = vadd.f32 %v796, %v797
    %v799 = vmul.f32 %v611, %v680
    %v800 = vadd.f32 %v798, %v799
    %v801 = vmul.f32 %v585, %v684
    %v802 = vadd.f32 %v800, %v801
    %v803 = vmul.f32 %v643, %v689
    %v804 = vadd.f32 %v802, %v803
    %v805 = vmul.f32 %v610, %v694
    %v806 = vadd.f32 %v804, %v805
    %v807 = vmul.f32 %v586, %v698
    %v808 = vadd.f32 %v806, %v807
    %v809 = vmul.f32 %v642, %v703
    %v810 = vadd.f32 %v808, %v809
    %v811 = vmul.f32 %v610, %v666
    %v812 = vmul.f32 %v586, %v670
    %v813 = vadd.f32 %v811, %v812
    %v814 = vmul.f32 %v642, %v675
    %v815 = vadd.f32 %v813, %v814
    %v816 = vmul.f32 %v609, %v680
    %v817 = vadd.f32 %v815, %v816
    %v818 = vmul.f32 %v587, %v684
    %v819 = vadd.f32 %v817, %v818
    %v820 = vmul.f32 %v641, %v689
    %v821 = vadd.f32 %v819, %v820
    %v822 = vmul.f32 %v608, %v694
    %v823 = vadd.f32 %v821, %v822
    %v824 = vmul.f32 %v588, %v698
    %v825 = vadd.f32 %v823, %v824
    %v826 = vmul.f32 %v656, %v703
    %v827 = vadd.f32 %v825, %v826
    %v828 = vlaneseq
    %v829 = vshrl.u32 %v828, 7
    %v830 = vsub.s32 0, %v829
    %v831 = vrot.slane %v659, %v830
    %v832 = vadd.f32 %v714, %v831
    %v833 = vadd.f32 %v731, %v831
    %v834 = vadd.f32 %v748, %v831
    %v835 = vadd.f32 %v765, %v831
    %v836 = vadd.f32 %v776, %v831
    %v837 = vadd.f32 %v793, %v831
    %v838 = vadd.f32 %v810, %v831
    %v839 = vadd.f32 %v827, %v831
    %v840 = vadd.f32 %v832, 3.0
    %v841 = vadd.f32 %v833, 3.0
    %v842 = vadd.f32 %v834, 3.0
    %v843 = vadd.f32 %v835, 3.0
    %v844 = vadd.f32 %v836, 3.0
    %v845 = vadd.f32 %v837, 3.0
    %v846 = vadd.f32 %v838, 3.0
    %v847 = vadd.f32 %v839, 3.0
    %v848 = vmax.f32 %v840, 0.0
    %v849 = vmax.f32 %v841, 0.0
    %v850 = vmax.f32 %v842, 0.0
    %v851 = vmax.f32 %v843, 0.0
    %v852 = vmax.f32 %v844, 0.0
    %v853 = vmax.f32 %v845, 0.0
    %v854 = vmax.f32 %v846, 0.0
    %v855 = vmax.f32 %v847, 0.0
    %v856 = vmin.f32 %v848, 6.0
    %v857 = vmin.f32 %v849, 6.0
    %v858 = vmin.f32 %v850, 6.0
    %v859 = vmin.f32 %v851, 6.0
    %v860 = vmin.f32 %v852, 6.0
    %v861 = vmin.f32 %v853, 6.0
    %v862 = vmin.f32 %v854, 6.0
    %v863 = vmin.f32 %v855, 6.0
    %v864 = vmul.f32 %v832, %v856
    %v865 = vmul.f32 %v833, %v857
    %v866 = vmul.f32 %v834, %v858
    %v867 = vmul.f32 %v835, %v859
    %v868 = vmul.f32 %v836, %v860
    %v869 = vmul.f32 %v837, %v861
    %v870 = vmul.f32 %v838, %v862
    %v871 = vmul.f32 %v839, %v863
    %v872 = vmul.f32 %v864, 0.16666667
    %v873 = vmul.f32 %v865, 0.16666667
    %v874 = vmul.f32 %v866, 0.16666667
    %v875 = vmul.f32 %v867, 0.16666667
    %v876 = vmul.f32 %v868, 0.16666667
    %v877 = vmul.f32 %v869, 0.16666667
    %v878 = vmul.f32 %v870, 0.16666667
    %v879 = vmul.f32 %v871, 0.16666667
    %v880 = vld [vmem:[%s1 + $0x40] sm:$0xff]
    %v881 = vld [vmem:[%s1 + $0x48] sm:$0xff]
    %v882 = vld [vmem:[%s1 + $0x50] sm:$0x1]
    %v883 = vlaneseq
    %v884 = vshrl.u32 %v883, 7
    %v885 = vsub.s32 0, %v884
    %v886 = vrot.slane %v882, %v885
    %v888 = vsel %vm35, %v872, 0
    %v891 = vsel %vm35, %v873, 0
    %v894 = vsel %vm35, %v874, 0
    %v897 = vsel %vm35, %v875, 0
    %v900 = vsel %vm35, %v876, 0
    %v903 = vsel %vm35, %v877, 0
    %v906 = vsel %vm35, %v878, 0
    %v909 = vsel %vm35, %v879, 0
    %911 = vmatprep.subr.mxu0 0.0
    %912 = vmatpush1.msra.mxu0 %v880
    %913 = vmatprep.subr.mxu0 0.0
    %914 = vmatpush1.msra.mxu0 %v881
    %915 = vmatprep.subr.mxu0 0.0
    %916 = vmatpush1.msra.mxu0 0.0
    %917 = vmatprep.subr.mxu0 0.0
    %918 = vmatpush1.msra.mxu0 0.0
    %919 = vmatprep.subr.mxu0 0.0
    %920 = vmatpush1.msra.mxu0 0.0
    %921 = vmatprep.subr.mxu0 0.0
    %922 = vmatpush1.msra.mxu0 0.0
    %923 = vmatprep.subr.mxu0 0.0
    %924 = vmatpush1.msra.mxu0 0.0
    %925 = vmatprep.subr.mxu0 0.0
    %926 = vmatpush1.msra.mxu0 0.0
    %927 = vmatprep.subr.mxu0 0.0
    %928 = vmatpush1.msra.mxu0 0.0
    %929 = vmatprep.subr.mxu0 0.0
    %930 = vmatpush1.msra.mxu0 0.0
    %931 = vmatprep.subr.mxu0 0.0
    %932 = vmatpush1.msra.mxu0 0.0
    %933 = vmatprep.subr.mxu0 0.0
    %934 = vmatpush1.msra.mxu0 0.0
    %935 = vmatprep.subr.mxu0 0.0
    %936 = vmatpush1.msra.mxu0 0.0
    %937 = vmatprep.subr.mxu0 0.0
    %938 = vmatpush1.msra.mxu0 0.0
    %939 = vmatprep.subr.mxu0 0.0
    %940 = vmatpush1.msra.mxu0 0.0
    %941 = vmatprep.subr.mxu0 0.0
    %942 = vmatpush1.msra.mxu0 0.0
    %943 = vmatprep.subr.mxu0 0.0
    %944 = vmatpush1.msra.mxu0 0.0
    %945 = vmatprep.subr.mxu0 0.0
    %946 = vmatpush1.msra.mxu0 0.0
    %947 = vmatprep.subr.mxu0 0.0
    %948 = vmatpush1.msra.mxu0 0.0
    %949 = vmatprep.subr.mxu0 0.0
    %950 = vmatpush1.msra.mxu0 0.0
    %951 = vmatprep.subr.mxu0 0.0
    %952 = vmatpush1.msra.mxu0 0.0
    %953 = vmatprep.subr.mxu0 0.0
    %954 = vmatpush1.msra.mxu0 0.0
    %955 = vmatprep.subr.mxu0 0.0
    %956 = vmatpush1.msra.mxu0 0.0
    %957 = vmatprep.subr.mxu0 0.0
    %958 = vmatpush1.msra.mxu0 0.0
    %959 = vmatprep.subr.mxu0 0.0
    %960 = vmatpush1.msra.mxu0 0.0
    %961 = vmatprep.subr.mxu0 0.0
    %962 = vmatpush1.msra.mxu0 0.0
    %963 = vmatprep.subr.mxu0 0.0
    %964 = vmatpush1.msra.mxu0 0.0
    %965 = vmatprep.subr.mxu0 0.0
    %966 = vmatpush1.msra.mxu0 0.0
    %967 = vmatprep.subr.mxu0 0.0
    %968 = vmatpush1.msra.mxu0 0.0
    %969 = vmatprep.subr.mxu0 0.0
    %970 = vmatpush1.msra.mxu0 0.0
    %971 = vmatprep.subr.mxu0 0.0
    %972 = vmatpush1.msra.mxu0 0.0
    %973 = vmatprep.subr.mxu0 0.0
    %974 = vmatpush1.msra.mxu0 0.0
    %975 = vmatprep.mubr.f32.mxu0 0.0
    %976 = vmatmul.mubr.f32.gmra.mrb[0].mxu0 %v888
    %v977 = vpop.f32.mrb[0].mxu0
    %v978 = vadd.f32 %v886, %v977
    %v979 = vpop.f32.mrb[0].mxu0
    %980 = vmatprep.mubr.f32.mxu0 0.0
    %981 = vmatmul.mubr.f32.gmra.mrb[0].mxu0 %v891
    %v982 = vpop.f32.mrb[0].mxu0
    %v983 = vadd.f32 %v886, %v982
    %v984 = vpop.f32.mrb[0].mxu0
    %985 = vmatprep.mubr.f32.mxu0 0.0
    %986 = vmatmul.mubr.f32.gmra.mrb[0].mxu0 %v894
    %v987 = vpop.f32.mrb[0].mxu0
    %v988 = vadd.f32 %v886, %v987
    %v989 = vpop.f32.mrb[0].mxu0
    %990 = vmatprep.mubr.f32.mxu0 0.0
    %991 = vmatmul.mubr.f32.gmra.mrb[0].mxu0 %v897
    %v992 = vpop.f32.mrb[0].mxu0
    %v993 = vadd.f32 %v886, %v992
    %v994 = vpop.f32.mrb[0].mxu0
    %995 = vmatprep.mubr.f32.mxu0 0.0
    %996 = vmatmul.mubr.f32.gmra.mrb[0].mxu0 %v900
    %v997 = vpop.f32.mrb[0].mxu0
    %v998 = vadd.f32 %v886, %v997
    %v999 = vpop.f32.mrb[0].mxu0
    %1000 = vmatprep.mubr.f32.mxu0 0.0
    %1001 = vmatmul.mubr.f32.gmra.mrb[0].mxu0 %v903
    %v1002 = vpop.f32.mrb[0].mxu0
    %v1003 = vadd.f32 %v886, %v1002
    %v1004 = vpop.f32.mrb[0].mxu0
    %1005 = vmatprep.mubr.f32.mxu0 0.0
    %1006 = vmatmul.mubr.f32.gmra.mrb[0].mxu0 %v906
    %v1007 = vpop.f32.mrb[0].mxu0
    %v1008 = vadd.f32 %v886, %v1007
    %v1009 = vpop.f32.mrb[0].mxu0
    %1010 = vmatprep.mubr.f32.mxu0 0.0
    %1011 = vmatmul.mubr.f32.gmra.mrb[0].mxu0 %v909
    %v1012 = vpop.f32.mrb[0].mxu0
    %v1013 = vadd.f32 %v886, %v1012
    %v1014 = vpop.f32.mrb[0].mxu0
    %1015 = vdwg.mxu0
    %v1016 = vadd.f32 %v978, 3.0
    %v1017 = vadd.f32 %v983, 3.0
    %v1018 = vadd.f32 %v988, 3.0
    %v1019 = vadd.f32 %v993, 3.0
    %v1020 = vadd.f32 %v998, 3.0
    %v1021 = vadd.f32 %v1003, 3.0
    %v1022 = vadd.f32 %v1008, 3.0
    %v1023 = vadd.f32 %v1013, 3.0
    %v1024 = vmax.f32 %v1016, 0.0
    %v1025 = vmax.f32 %v1017, 0.0
    %v1026 = vmax.f32 %v1018, 0.0
    %v1027 = vmax.f32 %v1019, 0.0
    %v1028 = vmax.f32 %v1020, 0.0
    %v1029 = vmax.f32 %v1021, 0.0
    %v1030 = vmax.f32 %v1022, 0.0
    %v1031 = vmax.f32 %v1023, 0.0
    %v1032 = vmin.f32 %v1024, 6.0
    %v1033 = vmin.f32 %v1025, 6.0
    %v1034 = vmin.f32 %v1026, 6.0
    %v1035 = vmin.f32 %v1027, 6.0
    %v1036 = vmin.f32 %v1028, 6.0
    %v1037 = vmin.f32 %v1029, 6.0
    %v1038 = vmin.f32 %v1030, 6.0
    %v1039 = vmin.f32 %v1031, 6.0
    %v1040 = vmul.f32 %v978, %v1032
    %v1041 = vmul.f32 %v983, %v1033
    %v1042 = vmul.f32 %v988, %v1034
    %v1043 = vmul.f32 %v993, %v1035
    %v1044 = vmul.f32 %v998, %v1036
    %v1045 = vmul.f32 %v1003, %v1037
    %v1046 = vmul.f32 %v1008, %v1038
    %v1047 = vmul.f32 %v1013, %v1039
    %v1048 = vmul.f32 %v1040, 0.16666667
    %v1049 = vmul.f32 %v1041, 0.16666667
    %v1050 = vmul.f32 %v1042, 0.16666667
    %v1051 = vmul.f32 %v1043, 0.16666667
    %v1052 = vmul.f32 %v1044, 0.16666667
    %v1053 = vmul.f32 %v1045, 0.16666667
    %v1054 = vmul.f32 %v1046, 0.16666667
    %v1055 = vmul.f32 %v1047, 0.16666667
    %v1056 = vrot.slane %v1048, 7
    %v1057 = vrot.slane %v1049, 7
    %v1058 = vrot.slane %v1050, 7
    %v1059 = vrot.slane %v1051, 7
    %v1060 = vrot.slane %v1052, 7
    %v1061 = vrot.slane %v1053, 7
    %v1062 = vrot.slane %v1054, 7
    %v1063 = vrot.slane %v1055, 7
    %v1064 = vsel %vm607, %v1062, %v1063
    %v1065 = vsel %vm607, %v1061, %v1062
    %v1066 = vsel %vm607, %v1060, %v1061
    %v1067 = vsel %vm607, %v1059, %v1060
    %v1068 = vsel %vm607, %v1058, %v1059
    %v1069 = vsel %vm607, %v1057, %v1058
    %v1070 = vsel %vm607, %v1056, %v1057
    %v1071 = vsel %vm607, %v1063, %v1056
    %v1072 = vrot.slane %v1048, 1
    %v1073 = vrot.slane %v1049, 1
    %v1074 = vrot.slane %v1050, 1
    %v1075 = vrot.slane %v1051, 1
    %v1076 = vrot.slane %v1052, 1
    %v1077 = vrot.slane %v1053, 1
    %v1078 = vrot.slane %v1054, 1
    %v1079 = vrot.slane %v1055, 1
    %v1080 = vsel %vm640, %v1078, %v1079
    %v1081 = vsel %vm640, %v1077, %v1078
    %v1082 = vsel %vm640, %v1076, %v1077
    %v1083 = vsel %vm640, %v1075, %v1076
    %v1084 = vsel %vm640, %v1074, %v1075
    %v1085 = vsel %vm640, %v1073, %v1074
    %v1086 = vsel %vm640, %v1072, %v1073
    %v1087 = vsel %vm640, %v1079, %v1072
    %v1088 = vld [vmem:[%s1 + $0x58] sm:$0xff]
    %v1089 = vld [vmem:[%s1 + $0x60] sm:$0x1]
    %v1090 = vld [vmem:[%s1 + $0x68] sm:$0x1]
    %v1091 = vlaneseq
    %v1092 = vshrl.u32 %v1091, 7
    %v1093 = vsub.s32 0, %v1092
    %v1094 = vrot.slane %v1088, %v1093
    %v1095 = vsel %vm660, %v1094, 0.0
    %v1096 = vlaneseq
    %v1097 = vshrl.u32 %v1096, 7
    %v1098 = vsub.s32 1, %v1097
    %v1099 = vrot.slane %v1088, %v1098
    %v1100 = vlaneseq
    %v1101 = vshrl.u32 %v1100, 7
    %v1102 = vsub.s32 2, %v1101
    %v1103 = vrot.slane %v1088, %v1102
    %v1104 = vsel %vm661, %v1103, 0.0
    %v1105 = vlaneseq
    %v1106 = vshrl.u32 %v1105, 7
    %v1107 = vsub.s32 3, %v1106
    %v1108 = vrot.slane %v1088, %v1107
    %v1109 = vsel %vm660, %v1108, 0.0
    %v1110 = vlaneseq
    %v1111 = vshrl.u32 %v1110, 7
    %v1112 = vsub.s32 4, %v1111
    %v1113 = vrot.slane %v1088, %v1112
    %v1114 = vlaneseq
    %v1115 = vshrl.u32 %v1114, 7
    %v1116 = vsub.s32 5, %v1115
    %v1117 = vrot.slane %v1088, %v1116
    %v1118 = vsel %vm661, %v1117, 0.0
    %v1119 = vlaneseq
    %v1120 = vshrl.u32 %v1119, 7
    %v1121 = vsub.s32 6, %v1120
    %v1122 = vrot.slane %v1088, %v1121
    %v1123 = vsel %vm660, %v1122, 0.0
    %v1124 = vlaneseq
    %v1125 = vshrl.u32 %v1124, 7
    %v1126 = vsub.s32 7, %v1125
    %v1127 = vrot.slane %v1088, %v1126
    %v1128 = vlaneseq
    %v1129 = vshrl.u32 %v1128, 7
    %v1130 = vsub.s32 0, %v1129
    %v1131 = vrot.slane %v1089, %v1130
    %v1132 = vsel %vm661, %v1131, 0.0
    %v1133 = vmul.f32 %v1071, %v1109
    %v1134 = vmul.f32 %v1048, %v1113
    %v1135 = vadd.f32 %v1133, %v1134
    %v1136 = vmul.f32 %v1086, %v1118
    %v1137 = vadd.f32 %v1135, %v1136
    %v1138 = vmul.f32 %v1070, %v1123
    %v1139 = vadd.f32 %v1137, %v1138
    %v1140 = vmul.f32 %v1049, %v1127
    %v1141 = vadd.f32 %v1139, %v1140
    %v1142 = vmul.f32 %v1085, %v1132
    %v1143 = vadd.f32 %v1141, %v1142
    %v1144 = vmul.f32 %v1070, %v1095
    %v1145 = vmul.f32 %v1049, %v1099
    %v1146 = vadd.f32 %v1144, %v1145
    %v1147 = vmul.f32 %v1085, %v1104
    %v1148 = vadd.f32 %v1146, %v1147
    %v1149 = vmul.f32 %v1069, %v1109
    %v1150 = vadd.f32 %v1148, %v1149
    %v1151 = vmul.f32 %v1050, %v1113
    %v1152 = vadd.f32 %v1150, %v1151
    %v1153 = vmul.f32 %v1084, %v1118
    %v1154 = vadd.f32 %v1152, %v1153
    %v1155 = vmul.f32 %v1068, %v1123
    %v1156 = vadd.f32 %v1154, %v1155
    %v1157 = vmul.f32 %v1051, %v1127
    %v1158 = vadd.f32 %v1156, %v1157
    %v1159 = vmul.f32 %v1083, %v1132
    %v1160 = vadd.f32 %v1158, %v1159
    %v1161 = vmul.f32 %v1067, %v1109
    %v1162 = vmul.f32 %v1052, %v1113
    %v1163 = vadd.f32 %v1161, %v1162
    %v1164 = vmul.f32 %v1082, %v1118
    %v1165 = vadd.f32 %v1163, %v1164
    %v1166 = vmul.f32 %v1066, %v1123
    %v1167 = vadd.f32 %v1165, %v1166
    %v1168 = vmul.f32 %v1053, %v1127
    %v1169 = vadd.f32 %v1167, %v1168
    %v1170 = vmul.f32 %v1081, %v1132
    %v1171 = vadd.f32 %v1169, %v1170
    %v1172 = vmul.f32 %v1066, %v1095
    %v1173 = vmul.f32 %v1053, %v1099
    %v1174 = vadd.f32 %v1172, %v1173
    %v1175 = vmul.f32 %v1081, %v1104
    %v1176 = vadd.f32 %v1174, %v1175
    %v1177 = vmul.f32 %v1065, %v1109
    %v1178 = vadd.f32 %v1176, %v1177
    %v1179 = vmul.f32 %v1054, %v1113
    %v1180 = vadd.f32 %v1178, %v1179
    %v1181 = vmul.f32 %v1080, %v1118
    %v1182 = vadd.f32 %v1180, %v1181
    %v1183 = vmul.f32 %v1064, %v1123
    %v1184 = vadd.f32 %v1182, %v1183
    %v1185 = vmul.f32 %v1055, %v1127
    %v1186 = vadd.f32 %v1184, %v1185
    %v1187 = vmul.f32 %v1087, %v1132
    %v1188 = vadd.f32 %v1186, %v1187
    %v1189 = vlaneseq
    %v1190 = vshrl.u32 %v1189, 7
    %v1191 = vsub.s32 0, %v1190
    %v1192 = vrot.slane %v1090, %v1191
    %v1193 = vadd.f32 %v1143, %v1192
    %v1194 = vadd.f32 %v1160, %v1192
    %v1195 = vadd.f32 %v1171, %v1192
    %v1196 = vadd.f32 %v1188, %v1192
    %v1197 = vadd.f32 %v1193, 3.0
    %v1198 = vadd.f32 %v1194, 3.0
    %v1199 = vadd.f32 %v1195, 3.0
    %v1200 = vadd.f32 %v1196, 3.0
    %v1201 = vmax.f32 %v1197, 0.0
    %v1202 = vmax.f32 %v1198, 0.0
    %v1203 = vmax.f32 %v1199, 0.0
    %v1204 = vmax.f32 %v1200, 0.0
    %v1205 = vmin.f32 %v1201, 6.0
    %v1206 = vmin.f32 %v1202, 6.0
    %v1207 = vmin.f32 %v1203, 6.0
    %v1208 = vmin.f32 %v1204, 6.0
    %v1209 = vmul.f32 %v1193, %v1205
    %v1210 = vmul.f32 %v1194, %v1206
    %v1211 = vmul.f32 %v1195, %v1207
    %v1212 = vmul.f32 %v1196, %v1208
    %v1213 = vmul.f32 %v1209, 0.16666667
    %v1214 = vmul.f32 %v1210, 0.16666667
    %v1215 = vmul.f32 %v1211, 0.16666667
    %v1216 = vmul.f32 %v1212, 0.16666667
    %v1217 = vld [vmem:[%s1 + $0x70] sm:$0xff]
    %v1218 = vld [vmem:[%s1 + $0x78] sm:$0xff]
    %v1219 = vld [vmem:[%s1 + $0x80] sm:$0xff]
    %v1220 = vld [vmem:[%s1 + $0x88] sm:$0x1]
    %v1221 = vlaneseq
    %v1222 = vshrl.u32 %v1221, 7
    %v1223 = vsub.s32 0, %v1222
    %v1224 = vrot.slane %v1220, %v1223
    %vm1225 = vcmask 195584
    %v1227 = vsel %vm1225, %v1213, 0
    %v1230 = vsel %vm1225, %v1214, 0
    %v1233 = vsel %vm1225, %v1215, 0
    %v1236 = vsel %vm1225, %v1216, 0
    %1238 = vmatprep.subr.mxu0 0.0
    %1239 = vmatpush1.msra.mxu0 %v1217
    %1240 = vmatprep.subr.mxu0 0.0
    %1241 = vmatpush1.msra.mxu0 %v1218
    %1242 = vmatprep.subr.mxu0 0.0
    %1243 = vmatpush1.msra.mxu0 %v1219
    %1244 = vmatprep.subr.mxu0 0.0
    %1245 = vmatpush1.msra.mxu0 0.0
    %1246 = vmatprep.subr.mxu0 0.0
    %1247 = vmatpush1.msra.mxu0 0.0
    %1248 = vmatprep.subr.mxu0 0.0
    %1249 = vmatpush1.msra.mxu0 0.0
    %1250 = vmatprep.subr.mxu0 0.0
    %1251 = vmatpush1.msra.mxu0 0.0
    %1252 = vmatprep.subr.mxu0 0.0
    %1253 = vmatpush1.msra.mxu0 0.0
    %1254 = vmatprep.subr.mxu0 0.0
    %1255 = vmatpush1.msra.mxu0 0.0
    %1256 = vmatprep.subr.mxu0 0.0
    %1257 = vmatpush1.msra.mxu0 0.0
    %1258 = vmatprep.subr.mxu0 0.0
    %1259 = vmatpush1.msra.mxu0 0.0
    %1260 = vmatprep.subr.mxu0 0.0
    %1261 = vmatpush1.msra.mxu0 0.0
    %1262 = vmatprep.subr.mxu0 0.0
    %1263 = vmatpush1.msra.mxu0 0.0
    %1264 = vmatprep.subr.mxu0 0.0
    %1265 = vmatpush1.msra.mxu0 0.0
    %1266 = vmatprep.subr.mxu0 0.0
    %1267 = vmatpush1.msra.mxu0 0.0
    %1268 = vmatprep.subr.mxu0 0.0
    %1269 = vmatpush1.msra.mxu0 0.0
    %1270 = vmatprep.subr.mxu0 0.0
    %1271 = vmatpush1.msra.mxu0 0.0
    %1272 = vmatprep.subr.mxu0 0.0
    %1273 = vmatpush1.msra.mxu0 0.0
    %1274 = vmatprep.subr.mxu0 0.0
    %1275 = vmatpush1.msra.mxu0 0.0
    %1276 = vmatprep.subr.mxu0 0.0
    %1277 = vmatpush1.msra.mxu0 0.0
    %1278 = vmatprep.subr.mxu0 0.0
    %1279 = vmatpush1.msra.mxu0 0.0
    %1280 = vmatprep.subr.mxu0 0.0
    %1281 = vmatpush1.msra.mxu0 0.0
    %1282 = vmatprep.subr.mxu0 0.0
    %1283 = vmatpush1.msra.mxu0 0.0
    %1284 = vmatprep.subr.mxu0 0.0
    %1285 = vmatpush1.msra.mxu0 0.0
    %1286 = vmatprep.subr.mxu0 0.0
    %1287 = vmatpush1.msra.mxu0 0.0
    %1288 = vmatprep.subr.mxu0 0.0
    %1289 = vmatpush1.msra.mxu0 0.0
    %1290 = vmatprep.subr.mxu0 0.0
    %1291 = vmatpush1.msra.mxu0 0.0
    %1292 = vmatprep.subr.mxu0 0.0
    %1293 = vmatpush1.msra.mxu0 0.0
    %1294 = vmatprep.subr.mxu0 0.0
    %1295 = vmatpush1.msra.mxu0 0.0
    %1296 = vmatprep.subr.mxu0 0.0
    %1297 = vmatpush1.msra.mxu0 0.0
    %1298 = vmatprep.subr.mxu0 0.0
    %1299 = vmatpush1.msra.mxu0 0.0
    %1300 = vmatprep.subr.mxu0 0.0
    %1301 = vmatpush1.msra.mxu0 0.0
    %1302 = vmatprep.mubr.f32.mxu0 0.0
    %1303 = vmatmul.mubr.f32.gmra.mrb[0].mxu0 %v1227
    %v1304 = vpop.f32.mrb[0].mxu0
    %v1305 = vadd.f32 %v1224, %v1304
    %v1306 = vpop.f32.mrb[0].mxu0
    %1307 = vmatprep.mubr.f32.mxu0 0.0
    %1308 = vmatmul.mubr.f32.gmra.mrb[0].mxu0 %v1230
    %v1309 = vpop.f32.mrb[0].mxu0
    %v1310 = vadd.f32 %v1224, %v1309
    %v1311 = vpop.f32.mrb[0].mxu0
    %1312 = vmatprep.mubr.f32.mxu0 0.0
    %1313 = vmatmul.mubr.f32.gmra.mrb[0].mxu0 %v1233
    %v1314 = vpop.f32.mrb[0].mxu0
    %v1315 = vadd.f32 %v1224, %v1314
    %v1316 = vpop.f32.mrb[0].mxu0
    %1317 = vmatprep.mubr.f32.mxu0 0.0
    %1318 = vmatmul.mubr.f32.gmra.mrb[0].mxu0 %v1236
    %v1319 = vpop.f32.mrb[0].mxu0
    %v1320 = vadd.f32 %v1224, %v1319
    %v1321 = vpop.f32.mrb[0].mxu0
    %1322 = vdwg.mxu0
    %v1323 = vadd.f32 %v1305, 3.0
    %v1324 = vadd.f32 %v1310, 3.0
    %v1325 = vadd.f32 %v1315, 3.0
    %v1326 = vadd.f32 %v1320, 3.0
    %v1327 = vmax.f32 %v1323, 0.0
    %v1328 = vmax.f32 %v1324, 0.0
    %v1329 = vmax.f32 %v1325, 0.0
    %v1330 = vmax.f32 %v1326, 0.0
    %v1331 = vmin.f32 %v1327, 6.0
    %v1332 = vmin.f32 %v1328, 6.0
    %v1333 = vmin.f32 %v1329, 6.0
    %v1334 = vmin.f32 %v1330, 6.0
    %v1335 = vmul.f32 %v1305, %v1331
    %v1336 = vmul.f32 %v1310, %v1332
    %v1337 = vmul.f32 %v1315, %v1333
    %v1338 = vmul.f32 %v1320, %v1334
    %v1339 = vmul.f32 %v1335, 0.16666667
    %v1340 = vmul.f32 %v1336, 0.16666667
    %v1341 = vmul.f32 %v1337, 0.16666667
    %v1342 = vmul.f32 %v1338, 0.16666667
    %v1343 = vrot.slane %v1339, 7
    %v1344 = vrot.slane %v1340, 7
    %v1345 = vrot.slane %v1341, 7
    %v1346 = vrot.slane %v1342, 7
    %v1347 = vsel %vm607, %v1345, %v1346
    %v1348 = vsel %vm607, %v1344, %v1345
    %v1349 = vsel %vm607, %v1343, %v1344
    %v1350 = vsel %vm607, %v1346, %v1343
    %v1351 = vrot.slane %v1339, 1
    %v1352 = vrot.slane %v1340, 1
    %v1353 = vrot.slane %v1341, 1
    %v1354 = vrot.slane %v1342, 1
    %v1355 = vsel %vm640, %v1353, %v1354
    %v1356 = vsel %vm640, %v1352, %v1353
    %v1357 = vsel %vm640, %v1351, %v1352
    %v1358 = vsel %vm640, %v1354, %v1351
    %v1359 = vld [vmem:[%s1 + $0x90] sm:$0xff]
    %v1360 = vld [vmem:[%s1 + $0x98] sm:$0x1]
    %v1361 = vld [vmem:[%s1 + $0xa0] sm:$0x1]
    %v1362 = vlaneseq
    %v1363 = vshrl.u32 %v1362, 7
    %v1364 = vsub.s32 3, %v1363
    %v1365 = vrot.slane %v1359, %v1364
    %v1366 = vsel %vm660, %v1365, 0.0
    %v1367 = vlaneseq
    %v1368 = vshrl.u32 %v1367, 7
    %v1369 = vsub.s32 4, %v1368
    %v1370 = vrot.slane %v1359, %v1369
    %v1371 = vlaneseq
    %v1372 = vshrl.u32 %v1371, 7
    %v1373 = vsub.s32 5, %v1372
    %v1374 = vrot.slane %v1359, %v1373
    %v1375 = vsel %vm661, %v1374, 0.0
    %v1376 = vlaneseq
    %v1377 = vshrl.u32 %v1376, 7
    %v1378 = vsub.s32 6, %v1377
    %v1379 = vrot.slane %v1359, %v1378
    %v1380 = vsel %vm660, %v1379, 0.0
    %v1381 = vlaneseq
    %v1382 = vshrl.u32 %v1381, 7
    %v1383 = vsub.s32 7, %v1382
    %v1384 = vrot.slane %v1359, %v1383
    %v1385 = vlaneseq
    %v1386 = vshrl.u32 %v1385, 7
    %v1387 = vsub.s32 0, %v1386
    %v1388 = vrot.slane %v1360, %v1387
    %v1389 = vsel %vm661, %v1388, 0.0
    %v1390 = vmul.f32 %v1350, %v1366
    %v1391 = vmul.f32 %v1339, %v1370
    %v1392 = vadd.f32 %v1390, %v1391
    %v1393 = vmul.f32 %v1357, %v1375
    %v1394 = vadd.f32 %v1392, %v1393
    %v1395 = vmul.f32 %v1349, %v1380
    %v1396 = vadd.f32 %v1394, %v1395
    %v1397 = vmul.f32 %v1340, %v1384
    %v1398 = vadd.f32 %v1396, %v1397
    %v1399 = vmul.f32 %v1356, %v1389
    %v1400 = vadd.f32 %v1398, %v1399
    %v1401 = vmul.f32 %v1348, %v1366
    %v1402 = vmul.f32 %v1341, %v1370
    %v1403 = vadd.f32 %v1401, %v1402
    %v1404 = vmul.f32 %v1355, %v1375
    %v1405 = vadd.f32 %v1403, %v1404
    %v1406 = vmul.f32 %v1347, %v1380
    %v1407 = vadd.f32 %v1405, %v1406
    %v1408 = vmul.f32 %v1342, %v1384
    %v1409 = vadd.f32 %v1407, %v1408
    %v1410 = vmul.f32 %v1358, %v1389
    %v1411 = vadd.f32 %v1409, %v1410
    %v1412 = vlaneseq
    %v1413 = vshrl.u32 %v1412, 7
    %v1414 = vsub.s32 0, %v1413
    %v1415 = vrot.slane %v1361, %v1414
    %v1416 = vadd.f32 %v1400, %v1415
    %v1417 = vadd.f32 %v1411, %v1415
    %v1418 = vadd.f32 %v1416, 3.0
    %v1419 = vadd.f32 %v1417, 3.0
    %v1420 = vmax.f32 %v1418, 0.0
    %v1421 = vmax.f32 %v1419, 0.0
    %v1422 = vmin.f32 %v1420, 6.0
    %v1423 = vmin.f32 %v1421, 6.0
    %v1424 = vmul.f32 %v1416, %v1422
    %v1425 = vmul.f32 %v1417, %v1423
    %v1426 = vmul.f32 %v1424, 0.16666667
    %v1427 = vmul.f32 %v1425, 0.16666667
    %v1428 = vld [vmem:[%s1 + $0xa8] sm:$0xff]
    %v1429 = vld [vmem:[%s1 + $0xb0] sm:$0xff]
    %v1430 = vld [vmem:[%s1 + $0xb8] sm:$0xff]
    %v1431 = vld [vmem:[%s1 + $0xc0] sm:$0xff]
    %v1432 = vld [vmem:[%s1 + $0xc8] sm:$0xf]
    %v1433 = vld [vmem:[%s1 + $0xd0] sm:$0x1]
    %v1434 = vlaneseq
    %v1435 = vshrl.u32 %v1434, 7
    %v1436 = vsub.s32 0, %v1435
    %v1437 = vrot.slane %v1433, %v1436
    %vm1438 = vcmask 293888
    %v1440 = vsel %vm1438, %v1426, 0
    %v1443 = vsel %vm1438, %v1427, 0
    %vm1445 = vcmask 1043456
    %v1447 = vsel %vm1445, %v1432, 0
    %1449 = vmatprep.subr.mxu0 0.0
    %1450 = vmatpush1.msra.mxu0 %v1428
    %1451 = vmatprep.subr.mxu0 0.0
    %1452 = vmatpush1.msra.mxu0 %v1429
    %1453 = vmatprep.subr.mxu0 0.0
    %1454 = vmatpush1.msra.mxu0 %v1430
    %1455 = vmatprep.subr.mxu0 0.0
    %1456 = vmatpush1.msra.mxu0 %v1431
    %1457 = vmatprep.subr.mxu0 0.0
    %1458 = vmatpush1.msra.mxu0 %v1447
    %1459 = vmatprep.subr.mxu0 0.0
    %1460 = vmatpush1.msra.mxu0 0.0
    %1461 = vmatprep.subr.mxu0 0.0
    %1462 = vmatpush1.msra.mxu0 0.0
    %1463 = vmatprep.subr.mxu0 0.0
    %1464 = vmatpush1.msra.mxu0 0.0
    %1465 = vmatprep.subr.mxu0 0.0
    %1466 = vmatpush1.msra.mxu0 0.0
    %1467 = vmatprep.subr.mxu0 0.0
    %1468 = vmatpush1.msra.mxu0 0.0
    %1469 = vmatprep.subr.mxu0 0.0
    %1470 = vmatpush1.msra.mxu0 0.0
    %1471 = vmatprep.subr.mxu0 0.0
    %1472 = vmatpush1.msra.mxu0 0.0
    %1473 = vmatprep.subr.mxu0 0.0
    %1474 = vmatpush1.msra.mxu0 0.0
    %1475 = vmatprep.subr.mxu0 0.0
    %1476 = vmatpush1.msra.mxu0 0.0
    %1477 = vmatprep.subr.mxu0 0.0
    %1478 = vmatpush1.msra.mxu0 0.0
    %1479 = vmatprep.subr.mxu0 0.0
    %1480 = vmatpush1.msra.mxu0 0.0
    %1481 = vmatprep.subr.mxu0 0.0
    %1482 = vmatpush1.msra.mxu0 0.0
    %1483 = vmatprep.subr.mxu0 0.0
    %1484 = vmatpush1.msra.mxu0 0.0
    %1485 = vmatprep.subr.mxu0 0.0
    %1486 = vmatpush1.msra.mxu0 0.0
    %1487 = vmatprep.subr.mxu0 0.0
    %1488 = vmatpush1.msra.mxu0 0.0
    %1489 = vmatprep.subr.mxu0 0.0
    %1490 = vmatpush1.msra.mxu0 0.0
    %1491 = vmatprep.subr.mxu0 0.0
    %1492 = vmatpush1.msra.mxu0 0.0
    %1493 = vmatprep.subr.mxu0 0.0
    %1494 = vmatpush1.msra.mxu0 0.0
    %1495 = vmatprep.subr.mxu0 0.0
    %1496 = vmatpush1.msra.mxu0 0.0
    %1497 = vmatprep.subr.mxu0 0.0
    %1498 = vmatpush1.msra.mxu0 0.0
    %1499 = vmatprep.subr.mxu0 0.0
    %1500 = vmatpush1.msra.mxu0 0.0
    %1501 = vmatprep.subr.mxu0 0.0
    %1502 = vmatpush1.msra.mxu0 0.0
    %1503 = vmatprep.subr.mxu0 0.0
    %1504 = vmatpush1.msra.mxu0 0.0
    %1505 = vmatprep.subr.mxu0 0.0
    %1506 = vmatpush1.msra.mxu0 0.0
    %1507 = vmatprep.subr.mxu0 0.0
    %1508 = vmatpush1.msra.mxu0 0.0
    %1509 = vmatprep.subr.mxu0 0.0
    %1510 = vmatpush1.msra.mxu0 0.0
    %1511 = vmatprep.subr.mxu0 0.0
    %1512 = vmatpush1.msra.mxu0 0.0
    %1513 = vmatprep.mubr.f32.mxu0 0.0
    %1514 = vmatmul.mubr.f32.gmra.mrb[0].mxu0 %v1440
    %v1515 = vpop.f32.mrb[0].mxu0
    %v1516 = vadd.f32 %v1437, %v1515
    %v1517 = vpop.f32.mrb[0].mxu0
    %1518 = vmatprep.mubr.f32.mxu0 0.0
    %1519 = vmatmul.mubr.f32.gmra.mrb[0].mxu0 %v1443
    %v1520 = vpop.f32.mrb[0].mxu0
    %v1521 = vadd.f32 %v1437, %v1520
    %v1522 = vpop.f32.mrb[0].mxu0
    %1523 = vdwg.mxu0
    %v1524 = vld [vmem:[%s1 + $0xd8] sm:$0xff]
    %v1525 = vld [vmem:[%s1 + $0xe0] sm:$0xf]
    %v1526 = vld [vmem:[%s1 + $0xe8] sm:$0x1]
    %v1527 = vlaneseq
    %v1528 = vshrl.u32 %v1527, 7
    %v1529 = vsub.s32 0, %v1528
    %v1530 = vrot.slane %v1526, %v1529
    %vm1531 = vcmask 97280
    %v1533 = vsel %vm1531, %v1516, 0
    %v1536 = vsel %vm1531, %v1521, 0
    %v1539 = vsel %vm1445, %v1525, 0
    %1541 = vmatprep.subr.mxu0 0.0
    %1542 = vmatpush1.msra.mxu0 %v1524
    %1543 = vmatprep.subr.mxu0 0.0
    %1544 = vmatpush1.msra.mxu0 %v1539
    %1545 = vmatprep.subr.mxu0 0.0
    %1546 = vmatpush1.msra.mxu0 0.0
    %1547 = vmatprep.subr.mxu0 0.0
    %1548 = vmatpush1.msra.mxu0 0.0
    %1549 = vmatprep.subr.mxu0 0.0
    %1550 = vmatpush1.msra.mxu0 0.0
    %1551 = vmatprep.subr.mxu0 0.0
    %1552 = vmatpush1.msra.mxu0 0.0
    %1553 = vmatprep.subr.mxu0 0.0
    %1554 = vmatpush1.msra.mxu0 0.0
    %1555 = vmatprep.subr.mxu0 0.0
    %1556 = vmatpush1.msra.mxu0 0.0
    %1557 = vmatprep.subr.mxu0 0.0
    %1558 = vmatpush1.msra.mxu0 0.0
    %1559 = vmatprep.subr.mxu0 0.0
    %1560 = vmatpush1.msra.mxu0 0.0
    %1561 = vmatprep.subr.mxu0 0.0
    %1562 = vmatpush1.msra.mxu0 0.0
    %1563 = vmatprep.subr.mxu0 0.0
    %1564 = vmatpush1.msra.mxu0 0.0
    %1565 = vmatprep.subr.mxu0 0.0
    %1566 = vmatpush1.msra.mxu0 0.0
    %1567 = vmatprep.subr.mxu0 0.0
    %1568 = vmatpush1.msra.mxu0 0.0
    %1569 = vmatprep.subr.mxu0 0.0
    %1570 = vmatpush1.msra.mxu0 0.0
    %1571 = vmatprep.subr.mxu0 0.0
    %1572 = vmatpush1.msra.mxu0 0.0
    %1573 = vmatprep.subr.mxu0 0.0
    %1574 = vmatpush1.msra.mxu0 0.0
    %1575 = vmatprep.subr.mxu0 0.0
    %1576 = vmatpush1.msra.mxu0 0.0
    %1577 = vmatprep.subr.mxu0 0.0
    %1578 = vmatpush1.msra.mxu0 0.0
    %1579 = vmatprep.subr.mxu0 0.0
    %1580 = vmatpush1.msra.mxu0 0.0
    %1581 = vmatprep.subr.mxu0 0.0
    %1582 = vmatpush1.msra.mxu0 0.0
    %1583 = vmatprep.subr.mxu0 0.0
    %1584 = vmatpush1.msra.mxu0 0.0
    %1585 = vmatprep.subr.mxu0 0.0
    %1586 = vmatpush1.msra.mxu0 0.0
    %1587 = vmatprep.subr.mxu0 0.0
    %1588 = vmatpush1.msra.mxu0 0.0
    %1589 = vmatprep.subr.mxu0 0.0
    %1590 = vmatpush1.msra.mxu0 0.0
    %1591 = vmatprep.subr.mxu0 0.0
    %1592 = vmatpush1.msra.mxu0 0.0
    %1593 = vmatprep.subr.mxu0 0.0
    %1594 = vmatpush1.msra.mxu0 0.0
    %1595 = vmatprep.subr.mxu0 0.0
    %1596 = vmatpush1.msra.mxu0 0.0
    %1597 = vmatprep.subr.mxu0 0.0
    %1598 = vmatpush1.msra.mxu0 0.0
    %1599 = vmatprep.subr.mxu0 0.0
    %1600 = vmatpush1.msra.mxu0 0.0
    %1601 = vmatprep.subr.mxu0 0.0
    %1602 = vmatpush1.msra.mxu0 0.0
    %1603 = vmatprep.subr.mxu0 0.0
    %1604 = vmatpush1.msra.mxu0 0.0
    %1605 = vmatprep.mubr.f32.mxu0 0.0
    %1606 = vmatmul.mubr.f32.gmra.mrb[0].mxu0 %v1533
    %v1607 = vpop.f32.mrb[0].mxu0
    %v1608 = vadd.f32 %v1530, %v1607
    %v1609 = vpop.f32.mrb[0].mxu0
    %1610 = vmatprep.mubr.f32.mxu0 0.0
    %1611 = vmatmul.mubr.f32.gmra.mrb[0].mxu0 %v1536
    %v1612 = vpop.f32.mrb[0].mxu0
    %v1613 = vadd.f32 %v1530, %v1612
    %v1614 = vpop.f32.mrb[0].mxu0
    %1615 = vdwg.mxu0
    %v1616 = vadd.f32 %v1608, 3.0
    %v1617 = vadd.f32 %v1613, 3.0
    %v1618 = vmax.f32 %v1616, 0.0
    %v1619 = vmax.f32 %v1617, 0.0
    %v1620 = vmin.f32 %v1618, 6.0
    %v1621 = vmin.f32 %v1619, 6.0
    %v1622 = vmul.f32 %v1608, %v1620
    %v1623 = vmul.f32 %v1613, %v1621
    %v1624 = vmul.f32 %v1622, 0.16666667
    %v1625 = vmul.f32 %v1623, 0.16666667
    %v1626 = vrot.slane %v1624, 7
    %v1627 = vrot.slane %v1625, 7
    %v1628 = vsel %vm607, %v1626, %v1627
    %v1629 = vsel %vm607, %v1627, %v1626
    %v1630 = vrot.slane %v1624, 1
    %v1631 = vrot.slane %v1625, 1
    %v1632 = vsel %vm640, %v1630, %v1631
    %v1633 = vsel %vm640, %v1631, %v1630
    %v1634 = vld [vmem:[%s1 + $0xf0] sm:$0xff]
    %v1635 = vld [vmem:[%s1 + $0x100] sm:$0x1]
    %v1636 = vlaneseq
    %v1637 = vshrl.u32 %v1636, 7
    %v1638 = vsub.s32 3, %v1637
    %v1639 = vrot.slane %v1634, %v1638
    %v1640 = vsel %vm660, %v1639, 0.0
    %v1641 = vlaneseq
    %v1642 = vshrl.u32 %v1641, 7
    %v1643 = vsub.s32 4, %v1642
    %v1644 = vrot.slane %v1634, %v1643
    %v1645 = vlaneseq
    %v1646 = vshrl.u32 %v1645, 7
    %v1647 = vsub.s32 5, %v1646
    %v1648 = vrot.slane %v1634, %v1647
    %v1649 = vsel %vm661, %v1648, 0.0
    %v1650 = vmul.f32 %v1629, %v1640
    %v1651 = vmul.f32 %v1624, %v1644
    %v1652 = vadd.f32 %v1650, %v1651
    %v1653 = vmul.f32 %v1632, %v1649
    %v1654 = vadd.f32 %v1652, %v1653
    %v1655 = vmul.f32 %v1628, %v1640
    %v1656 = vmul.f32 %v1625, %v1644
    %v1657 = vadd.f32 %v1655, %v1656
    %v1658 = vmul.f32 %v1633, %v1649
    %v1659 = vadd.f32 %v1657, %v1658
    %v1660 = vlaneseq
    %v1661 = vshrl.u32 %v1660, 7
    %v1662 = vsub.s32 0, %v1661
    %v1663 = vrot.slane %v1635, %v1662
    %v1664 = vadd.f32 %v1654, %v1663
    %v1665 = vadd.f32 %v1659, %v1663
    %v1666 = vadd.f32 %v1664, 3.0
    %v1667 = vadd.f32 %v1665, 3.0
    %v1668 = vmax.f32 %v1666, 0.0
    %v1669 = vmax.f32 %v1667, 0.0
    %v1670 = vmin.f32 %v1668, 6.0
    %v1671 = vmin.f32 %v1669, 6.0
    %v1672 = vmul.f32 %v1664, %v1670
    %v1673 = vmul.f32 %v1665, %v1671
    %v1674 = vmul.f32 %v1672, 0.16666667
    %v1675 = vmul.f32 %v1673, 0.16666667
    %v1676 = vld [vmem:[%s1 + $0x108] sm:$0xff]
    %v1677 = vld [vmem:[%s1 + $0x110] sm:$0xff]
    %v1678 = vld [vmem:[%s1 + $0x118] sm:$0xff]
    %v1679 = vld [vmem:[%s1 + $0x120] sm:$0xff]
    %v1680 = vld [vmem:[%s1 + $0x128] sm:$0xff]
    %v1681 = vld [vmem:[%s1 + $0x130] sm:$0xff]
    %v1682 = vld [vmem:[%s1 + $0x138] sm:$0x1]
    %v1683 = vlaneseq
    %v1684 = vshrl.u32 %v1683, 7
    %v1685 = vsub.s32 0, %v1684
    %v1686 = vrot.slane %v1682, %v1685
    %vm1687 = vcmask 392192
    %v1689 = vsel %vm1687, %v1674, 0
    %v1692 = vsel %vm1687, %v1675, 0
    %1694 = vmatprep.subr.mxu0 0.0
    %1695 = vmatpush1.msra.mxu0 %v1676
    %1696 = vmatprep.subr.mxu0 0.0
    %1697 = vmatpush1.msra.mxu0 %v1677
    %1698 = vmatprep.subr.mxu0 0.0
    %1699 = vmatpush1.msra.mxu0 %v1678
    %1700 = vmatprep.subr.mxu0 0.0
    %1701 = vmatpush1.msra.mxu0 %v1679
    %1702 = vmatprep.subr.mxu0 0.0
    %1703 = vmatpush1.msra.mxu0 %v1680
    %1704 = vmatprep.subr.mxu0 0.0
    %1705 = vmatpush1.msra.mxu0 %v1681
    %1706 = vmatprep.subr.mxu0 0.0
    %1707 = vmatpush1.msra.mxu0 0.0
    %1708 = vmatprep.subr.mxu0 0.0
    %1709 = vmatpush1.msra.mxu0 0.0
    %1710 = vmatprep.subr.mxu0 0.0
    %1711 = vmatpush1.msra.mxu0 0.0
    %1712 = vmatprep.subr.mxu0 0.0
    %1713 = vmatpush1.msra.mxu0 0.0
    %1714 = vmatprep.subr.mxu0 0.0
    %1715 = vmatpush1.msra.mxu0 0.0
    %1716 = vmatprep.subr.mxu0 0.0
    %1717 = vmatpush1.msra.mxu0 0.0
    %1718 = vmatprep.subr.mxu0 0.0
    %1719 = vmatpush1.msra.mxu0 0.0
    %1720 = vmatprep.subr.mxu0 0.0
    %1721 = vmatpush1.msra.mxu0 0.0
    %1722 = vmatprep.subr.mxu0 0.0
    %1723 = vmatpush1.msra.mxu0 0.0
    %1724 = vmatprep.subr.mxu0 0.0
    %1725 = vmatpush1.msra.mxu0 0.0
    %1726 = vmatprep.subr.mxu0 0.0
    %1727 = vmatpush1.msra.mxu0 0.0
    %1728 = vmatprep.subr.mxu0 0.0
    %1729 = vmatpush1.msra.mxu0 0.0
    %1730 = vmatprep.subr.mxu0 0.0
    %1731 = vmatpush1.msra.mxu0 0.0
    %1732 = vmatprep.subr.mxu0 0.0
    %1733 = vmatpush1.msra.mxu0 0.0
    %1734 = vmatprep.subr.mxu0 0.0
    %1735 = vmatpush1.msra.mxu0 0.0
    %1736 = vmatprep.subr.mxu0 0.0
    %1737 = vmatpush1.msra.mxu0 0.0
    %1738 = vmatprep.subr.mxu0 0.0
    %1739 = vmatpush1.msra.mxu0 0.0
    %1740 = vmatprep.subr.mxu0 0.0
    %1741 = vmatpush1.msra.mxu0 0.0
    %1742 = vmatprep.subr.mxu0 0.0
    %1743 = vmatpush1.msra.mxu0 0.0
    %1744 = vmatprep.subr.mxu0 0.0
    %1745 = vmatpush1.msra.mxu0 0.0
    %1746 = vmatprep.subr.mxu0 0.0
    %1747 = vmatpush1.msra.mxu0 0.0
    %1748 = vmatprep.subr.mxu0 0.0
    %1749 = vmatpush1.msra.mxu0 0.0
    %1750 = vmatprep.subr.mxu0 0.0
    %1751 = vmatpush1.msra.mxu0 0.0
    %1752 = vmatprep.subr.mxu0 0.0
    %1753 = vmatpush1.msra.mxu0 0.0
    %1754 = vmatprep.subr.mxu0 0.0
    %1755 = vmatpush1.msra.mxu0 0.0
    %1756 = vmatprep.subr.mxu0 0.0
    %1757 = vmatpush1.msra.mxu0 0.0
    %1758 = vmatprep.mubr.f32.mxu0 0.0
    %1759 = vmatmul.mubr.f32.gmra.mrb[0].mxu0 %v1689
    %v1760 = vpop.f32.mrb[0].mxu0
    %v1761 = vadd.f32 %v1686, %v1760
    %v1762 = vpop.f32.mrb[0].mxu0
    %1763 = vmatprep.mubr.f32.mxu0 0.0
    %1764 = vmatmul.mubr.f32.gmra.mrb[0].mxu0 %v1692
    %v1765 = vpop.f32.mrb[0].mxu0
    %v1766 = vadd.f32 %v1686, %v1765
    %v1767 = vpop.f32.mrb[0].mxu0
    %1768 = vdwg.mxu0
    %v1769 = vadd.f32 %v1761, %v1516
    %v1770 = vadd.f32 %v1766, %v1521
    %v1771 = vld [vmem:[%s1 + $0x140] sm:$0xff]
    %v1772 = vld [vmem:[%s1 + $0x148] sm:$0xf]
    %v1773 = vld [vmem:[%s1 + $0x150] sm:$0x1]
    %v1774 = vlaneseq
    %v1775 = vshrl.u32 %v1774, 7
    %v1776 = vsub.s32 0, %v1775
    %v1777 = vrot.slane %v1773, %v1776
    %v1779 = vsel %vm1531, %v1769, 0
    %v1782 = vsel %vm1531, %v1770, 0
    %v1785 = vsel %vm1445, %v1772, 0
    %1787 = vmatprep.subr.mxu0 0.0
    %1788 = vmatpush1.msra.mxu0 %v1771
    %1789 = vmatprep.subr.mxu0 0.0
    %1790 = vmatpush1.msra.mxu0 %v1785
    %1791 = vmatprep.subr.mxu0 0.0
    %1792 = vmatpush1.msra.mxu0 0.0
    %1793 = vmatprep.subr.mxu0 0.0
    %1794 = vmatpush1.msra.mxu0 0.0
    %1795 = vmatprep.subr.mxu0 0.0
    %1796 = vmatpush1.msra.mxu0 0.0
    %1797 = vmatprep.subr.mxu0 0.0
    %1798 = vmatpush1.msra.mxu0 0.0
    %1799 = vmatprep.subr.mxu0 0.0
    %1800 = vmatpush1.msra.mxu0 0.0
    %1801 = vmatprep.subr.mxu0 0.0
    %1802 = vmatpush1.msra.mxu0 0.0
    %1803 = vmatprep.subr.mxu0 0.0
    %1804 = vmatpush1.msra.mxu0 0.0
    %1805 = vmatprep.subr.mxu0 0.0
    %1806 = vmatpush1.msra.mxu0 0.0
    %1807 = vmatprep.subr.mxu0 0.0
    %1808 = vmatpush1.msra.mxu0 0.0
    %1809 = vmatprep.subr.mxu0 0.0
    %1810 = vmatpush1.msra.mxu0 0.0
    %1811 = vmatprep.subr.mxu0 0.0
    %1812 = vmatpush1.msra.mxu0 0.0
    %1813 = vmatprep.subr.mxu0 0.0
    %1814 = vmatpush1.msra.mxu0 0.0
    %1815 = vmatprep.subr.mxu0 0.0
    %1816 = vmatpush1.msra.mxu0 0.0
    %1817 = vmatprep.subr.mxu0 0.0
    %1818 = vmatpush1.msra.mxu0 0.0
    %1819 = vmatprep.subr.mxu0 0.0
    %1820 = vmatpush1.msra.mxu0 0.0
    %1821 = vmatprep.subr.mxu0 0.0
    %1822 = vmatpush1.msra.mxu0 0.0
    %1823 = vmatprep.subr.mxu0 0.0
    %1824 = vmatpush1.msra.mxu0 0.0
    %1825 = vmatprep.subr.mxu0 0.0
    %1826 = vmatpush1.msra.mxu0 0.0
    %1827 = vmatprep.subr.mxu0 0.0
    %1828 = vmatpush1.msra.mxu0 0.0
    %1829 = vmatprep.subr.mxu0 0.0
    %1830 = vmatpush1.msra.mxu0 0.0
    %1831 = vmatprep.subr.mxu0 0.0
    %1832 = vmatpush1.msra.mxu0 0.0
    %1833 = vmatprep.subr.mxu0 0.0
    %1834 = vmatpush1.msra.mxu0 0.0
    %1835 = vmatprep.subr.mxu0 0.0
    %1836 = vmatpush1.msra.mxu0 0.0
    %1837 = vmatprep.subr.mxu0 0.0
    %1838 = vmatpush1.msra.mxu0 0.0
    %1839 = vmatprep.subr.mxu0 0.0
    %1840 = vmatpush1.msra.mxu0 0.0
    %1841 = vmatprep.subr.mxu0 0.0
    %1842 = vmatpush1.msra.mxu0 0.0
    %1843 = vmatprep.subr.mxu0 0.0
    %1844 = vmatpush1.msra.mxu0 0.0
    %1845 = vmatprep.subr.mxu0 0.0
    %1846 = vmatpush1.msra.mxu0 0.0
    %1847 = vmatprep.subr.mxu0 0.0
    %1848 = vmatpush1.msra.mxu0 0.0
    %1849 = vmatprep.subr.mxu0 0.0
    %1850 = vmatpush1.msra.mxu0 0.0
    %1851 = vmatprep.mubr.f32.mxu0 0.0
    %1852 = vmatmul.mubr.f32.gmra.mrb[0].mxu0 %v1779
    %v1853 = vpop.f32.mrb[0].mxu0
    %v1854 = vadd.f32 %v1777, %v1853
    %v1855 = vpop.f32.mrb[0].mxu0
    %1856 = vmatprep.mubr.f32.mxu0 0.0
    %1857 = vmatmul.mubr.f32.gmra.mrb[0].mxu0 %v1782
    %v1858 = vpop.f32.mrb[0].mxu0
    %v1859 = vadd.f32 %v1777, %v1858
    %v1860 = vpop.f32.mrb[0].mxu0
    %1861 = vdwg.mxu0
    %v1862 = vadd.f32 %v1854, 3.0
    %v1863 = vadd.f32 %v1859, 3.0
    %v1864 = vmax.f32 %v1862, 0.0
    %v1865 = vmax.f32 %v1863, 0.0
    %v1866 = vmin.f32 %v1864, 6.0
    %v1867 = vmin.f32 %v1865, 6.0
    %v1868 = vmul.f32 %v1854, %v1866
    %v1869 = vmul.f32 %v1859, %v1867
    %v1870 = vmul.f32 %v1868, 0.16666667
    %v1871 = vmul.f32 %v1869, 0.16666667
    %1872 = vst [vmem:[#allocation2] sm:$0xff] %v1870
    %1873 = vst [vmem:[#allocation2 + $0x8] sm:$0xff] %v1871
    // Predicated region
    $region10: #{mn_forward.1} parent=1 // pred_check
      _
    $region11: #{mn_forward.1} parent=1 // pred_check_branch
      %1875 = sbr.rel (0) target = $region13
    $region12: #{mn_forward.1} parent=1 // pred_region
      %s1877 = ssub.s32 256, 256
      %1878 = vsyncadd [#allocation3], %s1877
      %s1879 = sshll.u32 [#allocation2], 4
      %s1880 = int_to_ptr.vmem [resolvable:$true] %s1879
      %1885 = dma.vmem_to_hbm [thread:$0]  %s1880, 256, %s2, [#allocation3], 128, 128, 8
    $region13: #{mn_forward.1} parent=1 // pred_fallthru
      _
    // Predicated region
    $region14: #{mn_forward.1} parent=1 // pred_check
      _
    $region15: #{mn_forward.1} parent=1 // pred_check_branch
      %1887 = sbr.rel (0) target = $region17
    $region16: #{mn_forward.1} parent=1 // pred_region
      %1888 = dma.done [#allocation3], 256
    $region17: #{mn_forward.1} parent=1 // pred_fallthru
      _
    %1889 = vsyncpa [#allocation3], 1

</llo_original>
